<compile_context>
chip_gen: v6e
topology: v6e:2x2x1
jax: 0.10.0
libtpu: 0.0.40
codegen_flags: <defaults>
</compile_context>

<pallas_src>
import jax
import jax.numpy as jnp
from jax import lax
from jax.experimental import pallas as pl
from jax.experimental.pallas import tpu as pltpu

# ---- model hyperparameters (small synthetic config) ----
B, L, C = 2, 16, 8          # batch, seq_len (input_shape[0]), channels (input_shape[-1])
PRED_LEN = 8
N_BLOCK = 2
FF_DIM = 32
EPS = 1e-5

# ---- packed-parameter slab layout (all offsets are static Python ints) ----
LANES = FF_DIM                              # 32 lanes is enough for every row
R_WT  = 0                                   # N_BLOCK x (L, L)   time-mix weights
R_WP  = R_WT + N_BLOCK * L                  # (PRED_LEN, L)      head weight
R_WF1 = R_WP + PRED_LEN                     # N_BLOCK x (C, FF)  feature-mix 1 (W1^T)
R_WF2 = R_WF1 + N_BLOCK * C                 # N_BLOCK x (FF, C)  feature-mix 2 (W2^T)
R_LN  = R_WF2 + N_BLOCK * FF_DIM            # N_BLOCK x 4 x (L, C)  [g1, b1, g2, b2]
R_BT  = R_LN + N_BLOCK * 4 * L              # N_BLOCK x (L, 1)   time-mix bias (column)
R_BP  = R_BT + N_BLOCK * L                  # (PRED_LEN, 1)      head bias (column)
R_RW  = R_BP + PRED_LEN                     # (1, B*C)           RevIN weight, tiled B times
R_RB  = R_RW + 1                            # (1, B*C)           RevIN bias, tiled B times
R_BF1 = R_RB + 1                            # N_BLOCK rows, (1, FF)
R_BF2 = R_BF1 + N_BLOCK                     # N_BLOCK rows, (1, C)
N_ROWS = ((R_BF2 + N_BLOCK + 7) // 8) * 8   # pad rows to a multiple of 8


def tsmixer_kernel(x_ref, p_ref, o_ref):
    x = x_ref[...].astype(jnp.float32)                        # (B, L, C)

    # ---- hoisted parameter reads (each read exactly once) ----
    rw_t = p_ref[R_RW:R_RW + 1, 0:B * C]                      # (1, B*C)
    rb_t = p_ref[R_RB:R_RB + 1, 0:B * C]
    rw = rw_t[:, 0:C]                                         # (1, C)
    rb = rb_t[:, 0:C]

    # ---- RevIN 'norm': per-sample stats over the sequence axis (one-pass, rsqrt) ----
    mean = jnp.mean(x, axis=1, keepdims=True)                 # (B, 1, C)
    msq = jnp.mean(x * x, axis=1, keepdims=True)
    var = msq - mean * mean
    inv_std = lax.rsqrt(var + EPS)
    stdev = (var + EPS) * inv_std                             # == sqrt(var + EPS)
    h = (x - mean) * inv_std * rw + rb                        # (B, L, C)

    # ---- LayerNorm over the whole (L, C) slab per sample, one-pass stats ----
    inv_n = 1.0 / float(L * C)

    def layer_norm(t, g, b):
        s = jnp.sum(jnp.sum(t, axis=2, keepdims=True), axis=1, keepdims=True)       # (B,1,1)
        q = jnp.sum(jnp.sum(t * t, axis=2, keepdims=True), axis=1, keepdims=True)
        mu = s * inv_n
        v = q * inv_n - mu * mu
        return (t - mu) * lax.rsqrt(v + EPS) * g + b

    # ---- ResBlocks (statically unrolled) ----
    for blk in range(N_BLOCK):
        # temporal mixing: one (L,L) @ (L, B*C) matmul (batch stacked along lanes)
        g1 = p_ref[pl.ds(R_LN + (4 * blk + 0) * L, L), 0:C]
        b1 = p_ref[pl.ds(R_LN + (4 * blk + 1) * L, L), 0:C]
        y = layer_norm(h, g1, b1)                             # (B, L, C)
        yc = jnp.concatenate([y[b] for b in range(B)], axis=1)        # (L, B*C)
        wt_blk = p_ref[pl.ds(R_WT + blk * L, L), 0:L]         # (L, L)
        bt_col = p_ref[pl.ds(R_BT + blk * L, L), 0:1]         # (L, 1)
        tm = jnp.dot(wt_blk, yc, preferred_element_type=jnp.float32) + bt_col
        tm = jnp.maximum(tm, 0.0)
        h = h + jnp.stack([tm[:, b * C:(b + 1) * C] for b in range(B)], axis=0)

        # feature mixing: (B*L, C) @ (C, FF) -> ReLU -> (B*L, FF) @ (FF, C)
        g2 = p_ref[pl.ds(R_LN + (4 * blk + 2) * L, L), 0:C]
        b2 = p_ref[pl.ds(R_LN + (4 * blk + 3) * L, L), 0:C]
        y2 = layer_norm(h, g2, b2).reshape(B * L, C)          # (B*L, C)
        wf1_blk = p_ref[pl.ds(R_WF1 + blk * C, C), :]         # (C, FF)
        bf1_row = p_ref[R_BF1 + blk:R_BF1 + blk + 1, :]       # (1, FF)
        wf2_blk = p_ref[pl.ds(R_WF2 + blk * FF_DIM, FF_DIM), 0:C]     # (FF, C)
        bf2_row = p_ref[R_BF2 + blk:R_BF2 + blk + 1, 0:C]     # (1, C)
        f = jnp.dot(y2, wf1_blk, preferred_element_type=jnp.float32) + bf1_row
        f = jnp.maximum(f, 0.0)
        f = jnp.dot(f, wf2_blk, preferred_element_type=jnp.float32) + bf2_row
        h = h + f.reshape(B, L, C)

    # ---- prediction head: one (P, L) @ (L, B*C) matmul ----
    hc = jnp.concatenate([h[b] for b in range(B)], axis=1)    # (L, B*C)
    wp_blk = p_ref[pl.ds(R_WP, PRED_LEN), 0:L]                # (P, L)
    bp_col = p_ref[pl.ds(R_BP, PRED_LEN), 0:1]                # (P, 1)
    out = jnp.dot(wp_blk, hc, preferred_element_type=jnp.float32) + bp_col    # (P, B*C)

    # ---- RevIN 'denorm' (reciprocal on the EUP instead of a divide) ----
    std_row = jnp.concatenate([stdev[b] for b in range(B)], axis=1)    # (1, B*C)
    mean_row = jnp.concatenate([mean[b] for b in range(B)], axis=1)    # (1, B*C)
    inv_rw_t = pl.reciprocal(rw_t + EPS * EPS, approx=True)
    out = (out - rb_t) * inv_rw_t * std_row + mean_row                 # (P, B*C)

    # ---- lane-dense output: single (1, B*PRED_LEN*C) = (1, 128) row, (b, p, c) order ----
    pieces = [out[p:p + 1, b * C:(b + 1) * C]
              for b in range(B) for p in range(PRED_LEN)]
    o_ref[...] = jnp.concatenate(pieces, axis=1).astype(o_ref.dtype)


def tsmixer_forward(x, slab):
    out_flat = pl.pallas_call(
        tsmixer_kernel,
        out_shape=jax.ShapeDtypeStruct((1, B * PRED_LEN * C), jnp.float32),
        grid_spec=pltpu.PrefetchScalarGridSpec(
            num_scalar_prefetch=0,
            grid=(1,),
            in_specs=[pl.BlockSpec((B, L, C), lambda i: (0, 0, 0)),
                      pl.BlockSpec((N_ROWS, LANES), lambda i: (0, 0))],
            out_specs=pl.BlockSpec((1, B * PRED_LEN * C), lambda i: (0, 0)),
        ),
        compiler_params=pltpu.CompilerParams(dimension_semantics=("arbitrary",)),
    )(x, slab)
    return out_flat.reshape(B, PRED_LEN, C)


def pack_params(params):
    """Pack all weights/biases into one flat f32 (N_ROWS, LANES) slab (single DMA)."""
    (rw, rb, ln1g, ln1b, wt, bt, ln2g, ln2b, wf1, bf1, wf2, bf2, wp, bp) = params
    slab = jnp.zeros((N_ROWS, LANES), jnp.float32)
    for blk in range(N_BLOCK):
        slab = slab.at[R_WT + blk * L:R_WT + (blk + 1) * L, 0:L].set(wt[blk])
        slab = slab.at[R_WF1 + blk * C:R_WF1 + (blk + 1) * C, 0:FF_DIM].set(wf1[blk])
        slab = slab.at[R_WF2 + blk * FF_DIM:R_WF2 + (blk + 1) * FF_DIM, 0:C].set(wf2[blk])
        for j, arr in enumerate((ln1g, ln1b, ln2g, ln2b)):
            r = R_LN + (4 * blk + j) * L
            slab = slab.at[r:r + L, 0:C].set(arr[blk])
        slab = slab.at[R_BT + blk * L:R_BT + (blk + 1) * L, 0:1].set(bt[blk])
        slab = slab.at[R_BF1 + blk, 0:FF_DIM].set(bf1[blk].reshape(FF_DIM))
        slab = slab.at[R_BF2 + blk, 0:C].set(bf2[blk].reshape(C))
    slab = slab.at[R_WP:R_WP + PRED_LEN, 0:L].set(wp)
    slab = slab.at[R_BP:R_BP + PRED_LEN, 0:1].set(bp)
    slab = slab.at[R_RW, 0:B * C].set(jnp.tile(rw.reshape(C), (B,)))
    slab = slab.at[R_RB, 0:B * C].set(jnp.tile(rb.reshape(C), (B,)))
    return slab


def reference(x, params):
    (rw, rb, ln1g, ln1b, wt, bt, ln2g, ln2b, wf1, bf1, wf2, bf2, wp, bp) = params
    mean = jnp.mean(x, axis=1, keepdims=True)
    var = jnp.mean((x - mean) ** 2, axis=1, keepdims=True)
    stdev = jnp.sqrt(var + EPS)
    h = (x - mean) / stdev * rw[None] + rb[None]
    for blk in range(N_BLOCK):
        m = jnp.mean(h, axis=(1, 2), keepdims=True)
        v = jnp.mean((h - m) ** 2, axis=(1, 2), keepdims=True)
        y = (h - m) / jnp.sqrt(v + EPS) * ln1g[blk][None] + ln1b[blk][None]
        y = jnp.maximum(jnp.einsum('ol,blc->boc', wt[blk], y) + bt[blk][None], 0.0)
        h = h + y
        m = jnp.mean(h, axis=(1, 2), keepdims=True)
        v = jnp.mean((h - m) ** 2, axis=(1, 2), keepdims=True)
        y = (h - m) / jnp.sqrt(v + EPS) * ln2g[blk][None] + ln2b[blk][None]
        y = jnp.maximum(jnp.einsum('blc,cf->blf', y, wf1[blk]) + bf1[blk][None], 0.0)
        y = jnp.einsum('blf,fc->blc', y, wf2[blk]) + bf2[blk][None]
        h = h + y
    out = jnp.einsum('pl,blc->bpc', wp, h) + bp[None]
    out = (out - rb[None]) / (rw[None] + EPS * EPS) * stdev + mean
    return out


def make_params(key):
    ks = jax.random.split(key, 14)
    n = lambda k, s: (0.1 * jax.random.normal(k, s)).astype(jnp.float32)
    rw = jnp.ones((1, C), jnp.float32) + 0.5 * n(ks[0], (1, C))
    rb = n(ks[1], (1, C))
    ln1g = jnp.ones((N_BLOCK, L, C), jnp.float32) + 0.5 * n(ks[2], (N_BLOCK, L, C))
    ln1b = n(ks[3], (N_BLOCK, L, C))
    wt = n(ks[4], (N_BLOCK, L, L))          # time-mix Linear(L, L) weight (out, in)
    bt = n(ks[5], (N_BLOCK, L, 1))
    ln2g = jnp.ones((N_BLOCK, L, C), jnp.float32) + 0.5 * n(ks[6], (N_BLOCK, L, C))
    ln2b = n(ks[7], (N_BLOCK, L, C))
    wf1 = n(ks[8], (N_BLOCK, C, FF_DIM))     # stored pre-transposed: y @ wf1
    bf1 = n(ks[9], (N_BLOCK, 1, FF_DIM))
    wf2 = n(ks[10], (N_BLOCK, FF_DIM, C))    # stored pre-transposed: y @ wf2
    bf2 = n(ks[11], (N_BLOCK, 1, C))
    wp = n(ks[12], (PRED_LEN, L))            # prediction Linear(L, pred_len) weight
    bp = n(ks[13], (PRED_LEN, 1))
    return (rw, rb, ln1g, ln1b, wt, bt, ln2g, ln2b, wf1, bf1, wf2, bf2, wp, bp)


if __name__ == "__main__":
    key = jax.random.PRNGKey(0)
    kx, kp = jax.random.split(key)
    x = (2.0 * jax.random.normal(kx, (B, L, C), jnp.float32) + 1.0)
    params = make_params(kp)
    slab = pack_params(params)

    out = jax.block_until_ready(tsmixer_forward(x, slab))
    ref = jax.block_until_ready(reference(x, params))

    assert out.shape == (B, PRED_LEN, C), out.shape
    assert jnp.allclose(out, ref, rtol=1e-2, atol=1e-2), (
        float(jnp.max(jnp.abs(out - ref))))

    print("KERNEL_OK")
</pallas_src>

<mosaic_0001>
module attributes {stable_mosaic.version = 11 : i64} {
  func.func @tsmixer_kernel(%arg0: i32, %arg1: memref<2x16x8xf32, #tpu.memory_space<vmem>>, %arg2: memref<296x32xf32, #tpu.memory_space<vmem>>, %arg3: memref<1x128xf32, #tpu.memory_space<vmem>>) attributes {dimension_semantics = [#tpu.dimension_semantics<arbitrary>], iteration_bounds = array<i64: 1>, scalar_prefetch = 0 : i64, scratch_operands = 0 : i64, tpu.core_type = #tpu.core_type<tc>, window_params = [{pipeline_mode = #tpu.pipeline_mode<synchronous>, transform_indices = @transform_0, window_bounds = array<i64: 2, 16, 8>}, {pipeline_mode = #tpu.pipeline_mode<synchronous>, transform_indices = @transform_1, window_bounds = array<i64: 296, 32>}, {pipeline_mode = #tpu.pipeline_mode<synchronous>, transform_indices = @transform_2, window_bounds = array<i64: 1, 128>}]} {
    %c0 = arith.constant 0 : index
    %c0_0 = arith.constant 0 : index
    %c0_1 = arith.constant 0 : index
    %0 = vector.load %arg1[%c0, %c0_0, %c0_1] : memref<2x16x8xf32, #tpu.memory_space<vmem>>, vector<2x16x8xf32>
    %c288 = arith.constant 288 : index
    %c0_2 = arith.constant 0 : index
    %1 = vector.load %arg2[%c288, %c0_2] : memref<296x32xf32, #tpu.memory_space<vmem>>, vector<1x16xf32>
    %c289 = arith.constant 289 : index
    %c0_3 = arith.constant 0 : index
    %2 = vector.load %arg2[%c289, %c0_3] : memref<296x32xf32, #tpu.memory_space<vmem>>, vector<1x16xf32>
    %3 = vector.extract_strided_slice %1 {offsets = [0, 0], sizes = [1, 8], strides = [1, 1]} : vector<1x16xf32> to vector<1x8xf32>
    %4 = vector.extract_strided_slice %2 {offsets = [0, 0], sizes = [1, 8], strides = [1, 1]} : vector<1x16xf32> to vector<1x8xf32>
    %cst = arith.constant dense<0.000000e+00> : vector<2x8xf32>
    %5 = vector.multi_reduction <add>, %0, %cst [1] : vector<2x16x8xf32> to vector<2x8xf32>
    %6 = vector.shape_cast %5 : vector<2x8xf32> to vector<2x1x8xf32>
    %cst_4 = arith.constant 1.600000e+01 : f32
    %7 = vector.broadcast %cst_4 : f32 to vector<2x1x8xf32>
    %8 = arith.divf %6, %7 : vector<2x1x8xf32>
    %9 = arith.mulf %0, %0 : vector<2x16x8xf32>
    %cst_5 = arith.constant dense<0.000000e+00> : vector<2x8xf32>
    %10 = vector.multi_reduction <add>, %9, %cst_5 [1] : vector<2x16x8xf32> to vector<2x8xf32>
    %11 = vector.shape_cast %10 : vector<2x8xf32> to vector<2x1x8xf32>
    %cst_6 = arith.constant 1.600000e+01 : f32
    %12 = vector.broadcast %cst_6 : f32 to vector<2x1x8xf32>
    %13 = arith.divf %11, %12 : vector<2x1x8xf32>
    %14 = arith.mulf %8, %8 : vector<2x1x8xf32>
    %15 = arith.subf %13, %14 : vector<2x1x8xf32>
    %cst_7 = arith.constant 9.99999974E-6 : f32
    %16 = vector.broadcast %cst_7 : f32 to vector<2x1x8xf32>
    %17 = arith.addf %15, %16 : vector<2x1x8xf32>
    %18 = math.rsqrt %17 : vector<2x1x8xf32>
    %cst_8 = arith.constant 9.99999974E-6 : f32
    %19 = vector.broadcast %cst_8 : f32 to vector<2x1x8xf32>
    %20 = arith.addf %15, %19 : vector<2x1x8xf32>
    %21 = arith.mulf %20, %18 : vector<2x1x8xf32>
    %22 = vector.broadcast %8 : vector<2x1x8xf32> to vector<2x16x8xf32>
    %23 = arith.subf %0, %22 : vector<2x16x8xf32>
    %24 = vector.broadcast %18 : vector<2x1x8xf32> to vector<2x16x8xf32>
    %25 = arith.mulf %23, %24 : vector<2x16x8xf32>
    %26 = vector.shape_cast %3 : vector<1x8xf32> to vector<1x1x8xf32>
    %27 = vector.broadcast %26 : vector<1x1x8xf32> to vector<2x16x8xf32>
    %28 = arith.mulf %25, %27 : vector<2x16x8xf32>
    %29 = vector.shape_cast %4 : vector<1x8xf32> to vector<1x1x8xf32>
    %30 = vector.broadcast %29 : vector<1x1x8xf32> to vector<2x16x8xf32>
    %31 = arith.addf %28, %30 : vector<2x16x8xf32>
    %c120 = arith.constant 120 : index
    %c0_9 = arith.constant 0 : index
    %32 = vector.load %arg2[%c120, %c0_9] : memref<296x32xf32, #tpu.memory_space<vmem>>, vector<16x8xf32>
    %c136 = arith.constant 136 : index
    %c0_10 = arith.constant 0 : index
    %33 = vector.load %arg2[%c136, %c0_10] : memref<296x32xf32, #tpu.memory_space<vmem>>, vector<16x8xf32>
    %cst_11 = arith.constant dense<0.000000e+00> : vector<2x16xf32>
    %34 = vector.multi_reduction <add>, %31, %cst_11 [2] : vector<2x16x8xf32> to vector<2x16xf32>
    %35 = vector.shape_cast %34 : vector<2x16xf32> to vector<2x16x1xf32>
    %cst_12 = arith.constant dense<0.000000e+00> : vector<2x1xf32>
    %36 = vector.multi_reduction <add>, %35, %cst_12 [1] : vector<2x16x1xf32> to vector<2x1xf32>
    %37 = vector.shape_cast %36 : vector<2x1xf32> to vector<2x1x1xf32>
    %38 = arith.mulf %31, %31 : vector<2x16x8xf32>
    %cst_13 = arith.constant dense<0.000000e+00> : vector<2x16xf32>
    %39 = vector.multi_reduction <add>, %38, %cst_13 [2] : vector<2x16x8xf32> to vector<2x16xf32>
    %40 = vector.shape_cast %39 : vector<2x16xf32> to vector<2x16x1xf32>
    %cst_14 = arith.constant dense<0.000000e+00> : vector<2x1xf32>
    %41 = vector.multi_reduction <add>, %40, %cst_14 [1] : vector<2x16x1xf32> to vector<2x1xf32>
    %42 = vector.shape_cast %41 : vector<2x1xf32> to vector<2x1x1xf32>
    %cst_15 = arith.constant 7.812500e-03 : f32
    %43 = vector.broadcast %cst_15 : f32 to vector<2x1x1xf32>
    %44 = arith.mulf %37, %43 : vector<2x1x1xf32>
    %cst_16 = arith.constant 7.812500e-03 : f32
    %45 = vector.broadcast %cst_16 : f32 to vector<2x1x1xf32>
    %46 = arith.mulf %42, %45 : vector<2x1x1xf32>
    %47 = arith.mulf %44, %44 : vector<2x1x1xf32>
    %48 = arith.subf %46, %47 : vector<2x1x1xf32>
    %49 = vector.broadcast %44 : vector<2x1x1xf32> to vector<2x16x8xf32>
    %50 = arith.subf %31, %49 : vector<2x16x8xf32>
    %cst_17 = arith.constant 9.99999974E-6 : f32
    %51 = vector.broadcast %cst_17 : f32 to vector<2x1x1xf32>
    %52 = arith.addf %48, %51 : vector<2x1x1xf32>
    %53 = math.rsqrt %52 : vector<2x1x1xf32>
    %54 = vector.broadcast %53 : vector<2x1x1xf32> to vector<2x16x8xf32>
    %55 = arith.mulf %50, %54 : vector<2x16x8xf32>
    %56 = vector.shape_cast %32 : vector<16x8xf32> to vector<1x16x8xf32>
    %57 = vector.broadcast %56 : vector<1x16x8xf32> to vector<2x16x8xf32>
    %58 = arith.mulf %55, %57 : vector<2x16x8xf32>
    %59 = vector.shape_cast %33 : vector<16x8xf32> to vector<1x16x8xf32>
    %60 = vector.broadcast %59 : vector<1x16x8xf32> to vector<2x16x8xf32>
    %61 = arith.addf %58, %60 : vector<2x16x8xf32>
    %62 = vector.extract_strided_slice %61 {offsets = [0, 0, 0], sizes = [1, 16, 8], strides = [1, 1, 1]} : vector<2x16x8xf32> to vector<1x16x8xf32>
    %63 = vector.shape_cast %62 : vector<1x16x8xf32> to vector<16x8xf32>
    %64 = vector.extract_strided_slice %61 {offsets = [1, 0, 0], sizes = [1, 16, 8], strides = [1, 1, 1]} : vector<2x16x8xf32> to vector<1x16x8xf32>
    %65 = vector.shape_cast %64 : vector<1x16x8xf32> to vector<16x8xf32>
    %66 = tpu.concatenate %63, %65 in 1 : vector<16x8xf32>, vector<16x8xf32> -> vector<16x16xf32>
    %c0_18 = arith.constant 0 : index
    %c0_19 = arith.constant 0 : index
    %67 = vector.load %arg2[%c0_18, %c0_19] : memref<296x32xf32, #tpu.memory_space<vmem>>, vector<16x16xf32>
    %c248 = arith.constant 248 : index
    %c0_20 = arith.constant 0 : index
    %68 = vector.load %arg2[%c248, %c0_20] : memref<296x32xf32, #tpu.memory_space<vmem>>, vector<16x1xf32>
    %cst_21 = arith.constant dense<0.000000e+00> : vector<16x16xf32>
    %69 = tpu.matmul %67, %66, %cst_21 {dimension_numbers = #tpu.dot_dimension_numbers<[1], [0], [0], [1], [0, 0, 1, 1], [], []>} : vector<16x16xf32>, vector<16x16xf32>, vector<16x16xf32> -> vector<16x16xf32>
    %70 = vector.broadcast %68 : vector<16x1xf32> to vector<16x16xf32>
    %71 = arith.addf %69, %70 : vector<16x16xf32>
    %cst_22 = arith.constant 0.000000e+00 : f32
    %72 = vector.broadcast %cst_22 : f32 to vector<16x16xf32>
    %73 = arith.maximumf %71, %72 : vector<16x16xf32>
    %74 = vector.extract_strided_slice %73 {offsets = [0, 0], sizes = [16, 8], strides = [1, 1]} : vector<16x16xf32> to vector<16x8xf32>
    %75 = vector.extract_strided_slice %73 {offsets = [0, 8], sizes = [16, 8], strides = [1, 1]} : vector<16x16xf32> to vector<16x8xf32>
    %76 = vector.shape_cast %74 : vector<16x8xf32> to vector<1x16x8xf32>
    %77 = vector.shape_cast %75 : vector<16x8xf32> to vector<1x16x8xf32>
    %78 = tpu.concatenate %76, %77 in 0 : vector<1x16x8xf32>, vector<1x16x8xf32> -> vector<2x16x8xf32>
    %79 = arith.addf %31, %78 : vector<2x16x8xf32>
    %c152 = arith.constant 152 : index
    %c0_23 = arith.constant 0 : index
    %80 = vector.load %arg2[%c152, %c0_23] : memref<296x32xf32, #tpu.memory_space<vmem>>, vector<16x8xf32>
    %c168 = arith.constant 168 : index
    %c0_24 = arith.constant 0 : index
    %81 = vector.load %arg2[%c168, %c0_24] : memref<296x32xf32, #tpu.memory_space<vmem>>, vector<16x8xf32>
    %cst_25 = arith.constant dense<0.000000e+00> : vector<2x16xf32>
    %82 = vector.multi_reduction <add>, %79, %cst_25 [2] : vector<2x16x8xf32> to vector<2x16xf32>
    %83 = vector.shape_cast %82 : vector<2x16xf32> to vector<2x16x1xf32>
    %cst_26 = arith.constant dense<0.000000e+00> : vector<2x1xf32>
    %84 = vector.multi_reduction <add>, %83, %cst_26 [1] : vector<2x16x1xf32> to vector<2x1xf32>
    %85 = vector.shape_cast %84 : vector<2x1xf32> to vector<2x1x1xf32>
    %86 = arith.mulf %79, %79 : vector<2x16x8xf32>
    %cst_27 = arith.constant dense<0.000000e+00> : vector<2x16xf32>
    %87 = vector.multi_reduction <add>, %86, %cst_27 [2] : vector<2x16x8xf32> to vector<2x16xf32>
    %88 = vector.shape_cast %87 : vector<2x16xf32> to vector<2x16x1xf32>
    %cst_28 = arith.constant dense<0.000000e+00> : vector<2x1xf32>
    %89 = vector.multi_reduction <add>, %88, %cst_28 [1] : vector<2x16x1xf32> to vector<2x1xf32>
    %90 = vector.shape_cast %89 : vector<2x1xf32> to vector<2x1x1xf32>
    %cst_29 = arith.constant 7.812500e-03 : f32
    %91 = vector.broadcast %cst_29 : f32 to vector<2x1x1xf32>
    %92 = arith.mulf %85, %91 : vector<2x1x1xf32>
    %cst_30 = arith.constant 7.812500e-03 : f32
    %93 = vector.broadcast %cst_30 : f32 to vector<2x1x1xf32>
    %94 = arith.mulf %90, %93 : vector<2x1x1xf32>
    %95 = arith.mulf %92, %92 : vector<2x1x1xf32>
    %96 = arith.subf %94, %95 : vector<2x1x1xf32>
    %97 = vector.broadcast %92 : vector<2x1x1xf32> to vector<2x16x8xf32>
    %98 = arith.subf %79, %97 : vector<2x16x8xf32>
    %cst_31 = arith.constant 9.99999974E-6 : f32
    %99 = vector.broadcast %cst_31 : f32 to vector<2x1x1xf32>
    %100 = arith.addf %96, %99 : vector<2x1x1xf32>
    %101 = math.rsqrt %100 : vector<2x1x1xf32>
    %102 = vector.broadcast %101 : vector<2x1x1xf32> to vector<2x16x8xf32>
    %103 = arith.mulf %98, %102 : vector<2x16x8xf32>
    %104 = vector.shape_cast %80 : vector<16x8xf32> to vector<1x16x8xf32>
    %105 = vector.broadcast %104 : vector<1x16x8xf32> to vector<2x16x8xf32>
    %106 = arith.mulf %103, %105 : vector<2x16x8xf32>
    %107 = vector.shape_cast %81 : vector<16x8xf32> to vector<1x16x8xf32>
    %108 = vector.broadcast %107 : vector<1x16x8xf32> to vector<2x16x8xf32>
    %109 = arith.addf %106, %108 : vector<2x16x8xf32>
    %110 = vector.shape_cast %109 : vector<2x16x8xf32> to vector<32x8xf32>
    %c40 = arith.constant 40 : index
    %c0_32 = arith.constant 0 : index
    %111 = vector.load %arg2[%c40, %c0_32] : memref<296x32xf32, #tpu.memory_space<vmem>>, vector<8x32xf32>
    %c290 = arith.constant 290 : index
    %c0_33 = arith.constant 0 : index
    %112 = vector.load %arg2[%c290, %c0_33] : memref<296x32xf32, #tpu.memory_space<vmem>>, vector<1x32xf32>
    %c56 = arith.constant 56 : index
    %c0_34 = arith.constant 0 : index
    %113 = vector.load %arg2[%c56, %c0_34] : memref<296x32xf32, #tpu.memory_space<vmem>>, vector<32x8xf32>
    %c292 = arith.constant 292 : index
    %c0_35 = arith.constant 0 : index
    %114 = vector.load %arg2[%c292, %c0_35] : memref<296x32xf32, #tpu.memory_space<vmem>>, vector<1x8xf32>
    %cst_36 = arith.constant dense<0.000000e+00> : vector<32x32xf32>
    %115 = tpu.matmul %110, %111, %cst_36 {dimension_numbers = #tpu.dot_dimension_numbers<[1], [0], [0], [1], [0, 0, 1, 1], [], []>} : vector<32x8xf32>, vector<8x32xf32>, vector<32x32xf32> -> vector<32x32xf32>
    %116 = vector.broadcast %112 : vector<1x32xf32> to vector<32x32xf32>
    %117 = arith.addf %115, %116 : vector<32x32xf32>
    %cst_37 = arith.constant 0.000000e+00 : f32
    %118 = vector.broadcast %cst_37 : f32 to vector<32x32xf32>
    %119 = arith.maximumf %117, %118 : vector<32x32xf32>
    %cst_38 = arith.constant dense<0.000000e+00> : vector<32x8xf32>
    %120 = tpu.matmul %119, %113, %cst_38 {dimension_numbers = #tpu.dot_dimension_numbers<[1], [0], [0], [1], [0, 0, 1, 1], [], []>} : vector<32x32xf32>, vector<32x8xf32>, vector<32x8xf32> -> vector<32x8xf32>
    %121 = vector.broadcast %114 : vector<1x8xf32> to vector<32x8xf32>
    %122 = arith.addf %120, %121 : vector<32x8xf32>
    %123 = vector.shape_cast %122 : vector<32x8xf32> to vector<2x16x8xf32>
    %124 = arith.addf %79, %123 : vector<2x16x8xf32>
    %c184 = arith.constant 184 : index
    %c0_39 = arith.constant 0 : index
    %125 = vector.load %arg2[%c184, %c0_39] : memref<296x32xf32, #tpu.memory_space<vmem>>, vector<16x8xf32>
    %c200 = arith.constant 200 : index
    %c0_40 = arith.constant 0 : index
    %126 = vector.load %arg2[%c200, %c0_40] : memref<296x32xf32, #tpu.memory_space<vmem>>, vector<16x8xf32>
    %cst_41 = arith.constant dense<0.000000e+00> : vector<2x16xf32>
    %127 = vector.multi_reduction <add>, %124, %cst_41 [2] : vector<2x16x8xf32> to vector<2x16xf32>
    %128 = vector.shape_cast %127 : vector<2x16xf32> to vector<2x16x1xf32>
    %cst_42 = arith.constant dense<0.000000e+00> : vector<2x1xf32>
    %129 = vector.multi_reduction <add>, %128, %cst_42 [1] : vector<2x16x1xf32> to vector<2x1xf32>
    %130 = vector.shape_cast %129 : vector<2x1xf32> to vector<2x1x1xf32>
    %131 = arith.mulf %124, %124 : vector<2x16x8xf32>
    %cst_43 = arith.constant dense<0.000000e+00> : vector<2x16xf32>
    %132 = vector.multi_reduction <add>, %131, %cst_43 [2] : vector<2x16x8xf32> to vector<2x16xf32>
    %133 = vector.shape_cast %132 : vector<2x16xf32> to vector<2x16x1xf32>
    %cst_44 = arith.constant dense<0.000000e+00> : vector<2x1xf32>
    %134 = vector.multi_reduction <add>, %133, %cst_44 [1] : vector<2x16x1xf32> to vector<2x1xf32>
    %135 = vector.shape_cast %134 : vector<2x1xf32> to vector<2x1x1xf32>
    %cst_45 = arith.constant 7.812500e-03 : f32
    %136 = vector.broadcast %cst_45 : f32 to vector<2x1x1xf32>
    %137 = arith.mulf %130, %136 : vector<2x1x1xf32>
    %cst_46 = arith.constant 7.812500e-03 : f32
    %138 = vector.broadcast %cst_46 : f32 to vector<2x1x1xf32>
    %139 = arith.mulf %135, %138 : vector<2x1x1xf32>
    %140 = arith.mulf %137, %137 : vector<2x1x1xf32>
    %141 = arith.subf %139, %140 : vector<2x1x1xf32>
    %142 = vector.broadcast %137 : vector<2x1x1xf32> to vector<2x16x8xf32>
    %143 = arith.subf %124, %142 : vector<2x16x8xf32>
    %cst_47 = arith.constant 9.99999974E-6 : f32
    %144 = vector.broadcast %cst_47 : f32 to vector<2x1x1xf32>
    %145 = arith.addf %141, %144 : vector<2x1x1xf32>
    %146 = math.rsqrt %145 : vector<2x1x1xf32>
    %147 = vector.broadcast %146 : vector<2x1x1xf32> to vector<2x16x8xf32>
    %148 = arith.mulf %143, %147 : vector<2x16x8xf32>
    %149 = vector.shape_cast %125 : vector<16x8xf32> to vector<1x16x8xf32>
    %150 = vector.broadcast %149 : vector<1x16x8xf32> to vector<2x16x8xf32>
    %151 = arith.mulf %148, %150 : vector<2x16x8xf32>
    %152 = vector.shape_cast %126 : vector<16x8xf32> to vector<1x16x8xf32>
    %153 = vector.broadcast %152 : vector<1x16x8xf32> to vector<2x16x8xf32>
    %154 = arith.addf %151, %153 : vector<2x16x8xf32>
    %155 = vector.extract_strided_slice %154 {offsets = [0, 0, 0], sizes = [1, 16, 8], strides = [1, 1, 1]} : vector<2x16x8xf32> to vector<1x16x8xf32>
    %156 = vector.shape_cast %155 : vector<1x16x8xf32> to vector<16x8xf32>
    %157 = vector.extract_strided_slice %154 {offsets = [1, 0, 0], sizes = [1, 16, 8], strides = [1, 1, 1]} : vector<2x16x8xf32> to vector<1x16x8xf32>
    %158 = vector.shape_cast %157 : vector<1x16x8xf32> to vector<16x8xf32>
    %159 = tpu.concatenate %156, %158 in 1 : vector<16x8xf32>, vector<16x8xf32> -> vector<16x16xf32>
    %c16 = arith.constant 16 : index
    %c0_48 = arith.constant 0 : index
    %160 = vector.load %arg2[%c16, %c0_48] : memref<296x32xf32, #tpu.memory_space<vmem>>, vector<16x16xf32>
    %c264 = arith.constant 264 : index
    %c0_49 = arith.constant 0 : index
    %161 = vector.load %arg2[%c264, %c0_49] : memref<296x32xf32, #tpu.memory_space<vmem>>, vector<16x1xf32>
    %cst_50 = arith.constant dense<0.000000e+00> : vector<16x16xf32>
    %162 = tpu.matmul %160, %159, %cst_50 {dimension_numbers = #tpu.dot_dimension_numbers<[1], [0], [0], [1], [0, 0, 1, 1], [], []>} : vector<16x16xf32>, vector<16x16xf32>, vector<16x16xf32> -> vector<16x16xf32>
    %163 = vector.broadcast %161 : vector<16x1xf32> to vector<16x16xf32>
    %164 = arith.addf %162, %163 : vector<16x16xf32>
    %cst_51 = arith.constant 0.000000e+00 : f32
    %165 = vector.broadcast %cst_51 : f32 to vector<16x16xf32>
    %166 = arith.maximumf %164, %165 : vector<16x16xf32>
    %167 = vector.extract_strided_slice %166 {offsets = [0, 0], sizes = [16, 8], strides = [1, 1]} : vector<16x16xf32> to vector<16x8xf32>
    %168 = vector.extract_strided_slice %166 {offsets = [0, 8], sizes = [16, 8], strides = [1, 1]} : vector<16x16xf32> to vector<16x8xf32>
    %169 = vector.shape_cast %167 : vector<16x8xf32> to vector<1x16x8xf32>
    %170 = vector.shape_cast %168 : vector<16x8xf32> to vector<1x16x8xf32>
    %171 = tpu.concatenate %169, %170 in 0 : vector<1x16x8xf32>, vector<1x16x8xf32> -> vector<2x16x8xf32>
    %172 = arith.addf %124, %171 : vector<2x16x8xf32>
    %c216 = arith.constant 216 : index
    %c0_52 = arith.constant 0 : index
    %173 = vector.load %arg2[%c216, %c0_52] : memref<296x32xf32, #tpu.memory_space<vmem>>, vector<16x8xf32>
    %c232 = arith.constant 232 : index
    %c0_53 = arith.constant 0 : index
    %174 = vector.load %arg2[%c232, %c0_53] : memref<296x32xf32, #tpu.memory_space<vmem>>, vector<16x8xf32>
    %cst_54 = arith.constant dense<0.000000e+00> : vector<2x16xf32>
    %175 = vector.multi_reduction <add>, %172, %cst_54 [2] : vector<2x16x8xf32> to vector<2x16xf32>
    %176 = vector.shape_cast %175 : vector<2x16xf32> to vector<2x16x1xf32>
    %cst_55 = arith.constant dense<0.000000e+00> : vector<2x1xf32>
    %177 = vector.multi_reduction <add>, %176, %cst_55 [1] : vector<2x16x1xf32> to vector<2x1xf32>
    %178 = vector.shape_cast %177 : vector<2x1xf32> to vector<2x1x1xf32>
    %179 = arith.mulf %172, %172 : vector<2x16x8xf32>
    %cst_56 = arith.constant dense<0.000000e+00> : vector<2x16xf32>
    %180 = vector.multi_reduction <add>, %179, %cst_56 [2] : vector<2x16x8xf32> to vector<2x16xf32>
    %181 = vector.shape_cast %180 : vector<2x16xf32> to vector<2x16x1xf32>
    %cst_57 = arith.constant dense<0.000000e+00> : vector<2x1xf32>
    %182 = vector.multi_reduction <add>, %181, %cst_57 [1] : vector<2x16x1xf32> to vector<2x1xf32>
    %183 = vector.shape_cast %182 : vector<2x1xf32> to vector<2x1x1xf32>
    %cst_58 = arith.constant 7.812500e-03 : f32
    %184 = vector.broadcast %cst_58 : f32 to vector<2x1x1xf32>
    %185 = arith.mulf %178, %184 : vector<2x1x1xf32>
    %cst_59 = arith.constant 7.812500e-03 : f32
    %186 = vector.broadcast %cst_59 : f32 to vector<2x1x1xf32>
    %187 = arith.mulf %183, %186 : vector<2x1x1xf32>
    %188 = arith.mulf %185, %185 : vector<2x1x1xf32>
    %189 = arith.subf %187, %188 : vector<2x1x1xf32>
    %190 = vector.broadcast %185 : vector<2x1x1xf32> to vector<2x16x8xf32>
    %191 = arith.subf %172, %190 : vector<2x16x8xf32>
    %cst_60 = arith.constant 9.99999974E-6 : f32
    %192 = vector.broadcast %cst_60 : f32 to vector<2x1x1xf32>
    %193 = arith.addf %189, %192 : vector<2x1x1xf32>
    %194 = math.rsqrt %193 : vector<2x1x1xf32>
    %195 = vector.broadcast %194 : vector<2x1x1xf32> to vector<2x16x8xf32>
    %196 = arith.mulf %191, %195 : vector<2x16x8xf32>
    %197 = vector.shape_cast %173 : vector<16x8xf32> to vector<1x16x8xf32>
    %198 = vector.broadcast %197 : vector<1x16x8xf32> to vector<2x16x8xf32>
    %199 = arith.mulf %196, %198 : vector<2x16x8xf32>
    %200 = vector.shape_cast %174 : vector<16x8xf32> to vector<1x16x8xf32>
    %201 = vector.broadcast %200 : vector<1x16x8xf32> to vector<2x16x8xf32>
    %202 = arith.addf %199, %201 : vector<2x16x8xf32>
    %203 = vector.shape_cast %202 : vector<2x16x8xf32> to vector<32x8xf32>
    %c48 = arith.constant 48 : index
    %c0_61 = arith.constant 0 : index
    %204 = vector.load %arg2[%c48, %c0_61] : memref<296x32xf32, #tpu.memory_space<vmem>>, vector<8x32xf32>
    %c291 = arith.constant 291 : index
    %c0_62 = arith.constant 0 : index
    %205 = vector.load %arg2[%c291, %c0_62] : memref<296x32xf32, #tpu.memory_space<vmem>>, vector<1x32xf32>
    %c88 = arith.constant 88 : index
    %c0_63 = arith.constant 0 : index
    %206 = vector.load %arg2[%c88, %c0_63] : memref<296x32xf32, #tpu.memory_space<vmem>>, vector<32x8xf32>
    %c293 = arith.constant 293 : index
    %c0_64 = arith.constant 0 : index
    %207 = vector.load %arg2[%c293, %c0_64] : memref<296x32xf32, #tpu.memory_space<vmem>>, vector<1x8xf32>
    %cst_65 = arith.constant dense<0.000000e+00> : vector<32x32xf32>
    %208 = tpu.matmul %203, %204, %cst_65 {dimension_numbers = #tpu.dot_dimension_numbers<[1], [0], [0], [1], [0, 0, 1, 1], [], []>} : vector<32x8xf32>, vector<8x32xf32>, vector<32x32xf32> -> vector<32x32xf32>
    %209 = vector.broadcast %205 : vector<1x32xf32> to vector<32x32xf32>
    %210 = arith.addf %208, %209 : vector<32x32xf32>
    %cst_66 = arith.constant 0.000000e+00 : f32
    %211 = vector.broadcast %cst_66 : f32 to vector<32x32xf32>
    %212 = arith.maximumf %210, %211 : vector<32x32xf32>
    %cst_67 = arith.constant dense<0.000000e+00> : vector<32x8xf32>
    %213 = tpu.matmul %212, %206, %cst_67 {dimension_numbers = #tpu.dot_dimension_numbers<[1], [0], [0], [1], [0, 0, 1, 1], [], []>} : vector<32x32xf32>, vector<32x8xf32>, vector<32x8xf32> -> vector<32x8xf32>
    %214 = vector.broadcast %207 : vector<1x8xf32> to vector<32x8xf32>
    %215 = arith.addf %213, %214 : vector<32x8xf32>
    %216 = vector.shape_cast %215 : vector<32x8xf32> to vector<2x16x8xf32>
    %217 = arith.addf %172, %216 : vector<2x16x8xf32>
    %218 = vector.extract_strided_slice %217 {offsets = [0, 0, 0], sizes = [1, 16, 8], strides = [1, 1, 1]} : vector<2x16x8xf32> to vector<1x16x8xf32>
    %219 = vector.shape_cast %218 : vector<1x16x8xf32> to vector<16x8xf32>
    %220 = vector.extract_strided_slice %217 {offsets = [1, 0, 0], sizes = [1, 16, 8], strides = [1, 1, 1]} : vector<2x16x8xf32> to vector<1x16x8xf32>
    %221 = vector.shape_cast %220 : vector<1x16x8xf32> to vector<16x8xf32>
    %222 = tpu.concatenate %219, %221 in 1 : vector<16x8xf32>, vector<16x8xf32> -> vector<16x16xf32>
    %c32 = arith.constant 32 : index
    %c0_68 = arith.constant 0 : index
    %223 = vector.load %arg2[%c32, %c0_68] : memref<296x32xf32, #tpu.memory_space<vmem>>, vector<8x16xf32>
    %c280 = arith.constant 280 : index
    %c0_69 = arith.constant 0 : index
    %224 = vector.load %arg2[%c280, %c0_69] : memref<296x32xf32, #tpu.memory_space<vmem>>, vector<8x1xf32>
    %cst_70 = arith.constant dense<0.000000e+00> : vector<8x16xf32>
    %225 = tpu.matmul %223, %222, %cst_70 {dimension_numbers = #tpu.dot_dimension_numbers<[1], [0], [0], [1], [0, 0, 1, 1], [], []>} : vector<8x16xf32>, vector<16x16xf32>, vector<8x16xf32> -> vector<8x16xf32>
    %226 = vector.broadcast %224 : vector<8x1xf32> to vector<8x16xf32>
    %227 = arith.addf %225, %226 : vector<8x16xf32>
    %228 = vector.extract_strided_slice %21 {offsets = [0, 0, 0], sizes = [1, 1, 8], strides = [1, 1, 1]} : vector<2x1x8xf32> to vector<1x1x8xf32>
    %229 = vector.shape_cast %228 : vector<1x1x8xf32> to vector<1x8xf32>
    %230 = vector.extract_strided_slice %21 {offsets = [1, 0, 0], sizes = [1, 1, 8], strides = [1, 1, 1]} : vector<2x1x8xf32> to vector<1x1x8xf32>
    %231 = vector.shape_cast %230 : vector<1x1x8xf32> to vector<1x8xf32>
    %232 = tpu.concatenate %229, %231 in 1 : vector<1x8xf32>, vector<1x8xf32> -> vector<1x16xf32>
    %233 = vector.extract_strided_slice %8 {offsets = [0, 0, 0], sizes = [1, 1, 8], strides = [1, 1, 1]} : vector<2x1x8xf32> to vector<1x1x8xf32>
    %234 = vector.shape_cast %233 : vector<1x1x8xf32> to vector<1x8xf32>
    %235 = vector.extract_strided_slice %8 {offsets = [1, 0, 0], sizes = [1, 1, 8], strides = [1, 1, 1]} : vector<2x1x8xf32> to vector<1x1x8xf32>
    %236 = vector.shape_cast %235 : vector<1x1x8xf32> to vector<1x8xf32>
    %237 = tpu.concatenate %234, %236 in 1 : vector<1x8xf32>, vector<1x8xf32> -> vector<1x16xf32>
    %cst_71 = arith.constant 1.000000e-10 : f32
    %238 = vector.broadcast %cst_71 : f32 to vector<1x16xf32>
    %239 = arith.addf %1, %238 : vector<1x16xf32>
    %240 = tpu.reciprocal %239 {approx = true} : vector<1x16xf32> -> vector<1x16xf32>
    %241 = vector.broadcast %2 : vector<1x16xf32> to vector<8x16xf32>
    %242 = arith.subf %227, %241 : vector<8x16xf32>
    %243 = vector.broadcast %240 : vector<1x16xf32> to vector<8x16xf32>
    %244 = arith.mulf %242, %243 : vector<8x16xf32>
    %245 = vector.broadcast %232 : vector<1x16xf32> to vector<8x16xf32>
    %246 = arith.mulf %244, %245 : vector<8x16xf32>
    %247 = vector.broadcast %237 : vector<1x16xf32> to vector<8x16xf32>
    %248 = arith.addf %246, %247 : vector<8x16xf32>
    %249 = vector.extract_strided_slice %248 {offsets = [0, 0], sizes = [1, 8], strides = [1, 1]} : vector<8x16xf32> to vector<1x8xf32>
    %250 = vector.extract_strided_slice %248 {offsets = [1, 0], sizes = [1, 8], strides = [1, 1]} : vector<8x16xf32> to vector<1x8xf32>
    %251 = vector.extract_strided_slice %248 {offsets = [2, 0], sizes = [1, 8], strides = [1, 1]} : vector<8x16xf32> to vector<1x8xf32>
    %252 = vector.extract_strided_slice %248 {offsets = [3, 0], sizes = [1, 8], strides = [1, 1]} : vector<8x16xf32> to vector<1x8xf32>
    %253 = vector.extract_strided_slice %248 {offsets = [4, 0], sizes = [1, 8], strides = [1, 1]} : vector<8x16xf32> to vector<1x8xf32>
    %254 = vector.extract_strided_slice %248 {offsets = [5, 0], sizes = [1, 8], strides = [1, 1]} : vector<8x16xf32> to vector<1x8xf32>
    %255 = vector.extract_strided_slice %248 {offsets = [6, 0], sizes = [1, 8], strides = [1, 1]} : vector<8x16xf32> to vector<1x8xf32>
    %256 = vector.extract_strided_slice %248 {offsets = [7, 0], sizes = [1, 8], strides = [1, 1]} : vector<8x16xf32> to vector<1x8xf32>
    %257 = vector.extract_strided_slice %248 {offsets = [0, 8], sizes = [1, 8], strides = [1, 1]} : vector<8x16xf32> to vector<1x8xf32>
    %258 = vector.extract_strided_slice %248 {offsets = [1, 8], sizes = [1, 8], strides = [1, 1]} : vector<8x16xf32> to vector<1x8xf32>
    %259 = vector.extract_strided_slice %248 {offsets = [2, 8], sizes = [1, 8], strides = [1, 1]} : vector<8x16xf32> to vector<1x8xf32>
    %260 = vector.extract_strided_slice %248 {offsets = [3, 8], sizes = [1, 8], strides = [1, 1]} : vector<8x16xf32> to vector<1x8xf32>
    %261 = vector.extract_strided_slice %248 {offsets = [4, 8], sizes = [1, 8], strides = [1, 1]} : vector<8x16xf32> to vector<1x8xf32>
    %262 = vector.extract_strided_slice %248 {offsets = [5, 8], sizes = [1, 8], strides = [1, 1]} : vector<8x16xf32> to vector<1x8xf32>
    %263 = vector.extract_strided_slice %248 {offsets = [6, 8], sizes = [1, 8], strides = [1, 1]} : vector<8x16xf32> to vector<1x8xf32>
    %264 = vector.extract_strided_slice %248 {offsets = [7, 8], sizes = [1, 8], strides = [1, 1]} : vector<8x16xf32> to vector<1x8xf32>
    %265 = tpu.concatenate %249, %250, %251, %252, %253, %254, %255, %256, %257, %258, %259, %260, %261, %262, %263, %264 in 1 : vector<1x8xf32>, vector<1x8xf32>, vector<1x8xf32>, vector<1x8xf32>, vector<1x8xf32>, vector<1x8xf32>, vector<1x8xf32>, vector<1x8xf32>, vector<1x8xf32>, vector<1x8xf32>, vector<1x8xf32>, vector<1x8xf32>, vector<1x8xf32>, vector<1x8xf32>, vector<1x8xf32>, vector<1x8xf32> -> vector<1x128xf32>
    %c0_72 = arith.constant 0 : index
    %c0_73 = arith.constant 0 : index
    %266 = vector.load %arg3[%c0_72, %c0_73] : memref<1x128xf32, #tpu.memory_space<vmem>>, vector<1x128xf32>
    tpu.vector_store %arg3[%c0_72, %c0_73], %265 {strides = array<i32>} : memref<1x128xf32, #tpu.memory_space<vmem>>, vector<1x128xf32>,
    return
  }
  func.func @transform_0(%arg0: i32) -> (i32, i32, i32) {
    %c0_i32 = arith.constant 0 : i32
    %c0_i32_0 = arith.constant 0 : i32
    %c0_i32_1 = arith.constant 0 : i32
    %c0_i32_2 = arith.constant 0 : i32
    return %c0_i32, %c0_i32_0, %c0_i32_1 : i32, i32, i32
  }
  func.func @transform_1(%arg0: i32) -> (i32, i32) {
    %c0_i32 = arith.constant 0 : i32
    %c0_i32_0 = arith.constant 0 : i32
    %c0_i32_1 = arith.constant 0 : i32
    return %c0_i32, %c0_i32_0 : i32, i32
  }
  func.func @transform_2(%arg0: i32) -> (i32, i32) {
    %c0_i32 = arith.constant 0 : i32
    %c0_i32_0 = arith.constant 0 : i32
    %c0_i32_1 = arith.constant 0 : i32
    return %c0_i32, %c0_i32_0 : i32, i32
  }
}

</mosaic_0001>

<llo_original>
// kernel: tpu_custom_call.1
$region0: #{tpu_custom_call.1}
  #allocation0 [shape = 'u32[]', space=smem, size = 0x4, offset = 0x4, fixed_abs, tag = 'smem constant byte address 0x4 - core index']
  #allocation1 [shape = 'u32[144,128]{1,0:T(1,128)}', space=vmem, size = 0x12000, scoped, tag = 'internal scratch']
  %s0 = inlined_call_operand.vmem [shape: f32[2,16,8], index: 0, kind: input, shape index: {}]
  %s1 = inlined_call_operand.vmem [shape: f32[296,32], index: 1, kind: input, shape index: {}]
  %s2 = inlined_call_operand.hbm [shape: f32[1,128], index: 2, kind: output, shape index: {}]
  %s3 = sld [smem:[#allocation0]]
  $region18: #{tpu_custom_call.1} parent=0
    _
  %s5 = ssub.s32 1, %s3
  %s6 = scalar_select 0, %s5, %s3
  $region1: #{tpu_custom_call.1} parent=0
    #allocation2 [shape = 'u8[512]{0}', space=vmem, size = 0x400, scoped, tag = 'output window, operand 0, single buffered']
    #allocation3 [shape = 's32[1]{0}', space=sflag, size = 0x4, scoped, tag = 'scoped memory for tpu_custom_call.1']
    %7 = vsyncpa [#allocation3], 0
    // Predicated region
    $region2: #{tpu_custom_call.1} parent=1 // pred_check
      _
    $region3: #{tpu_custom_call.1} parent=1 // pred_check_branch
      %9 = sbr.rel (0) target = $region5
    $region4: #{tpu_custom_call.1} parent=1 // pred_region
      _
    $region5: #{tpu_custom_call.1} parent=1 // pred_fallthru
      _
    // Predicated region
    $region6: #{tpu_custom_call.1} parent=1 // pred_check
      _
    $region7: #{tpu_custom_call.1} parent=1 // pred_check_branch
      %11 = sbr.rel (0) target = $region9
    $region8: #{tpu_custom_call.1} parent=1 // pred_region
      _
    $region9: #{tpu_custom_call.1} parent=1 // pred_fallthru
      _
    %v12 = vld [vmem:[%s0] sm:$0xff]
    %v13 = vld [vmem:[%s0 + $0x8] sm:$0xff]
    %v14 = vld [vmem:[%s0 + $0x10] sm:$0xff]
    %v15 = vld [vmem:[%s0 + $0x18] sm:$0xff]
    %v16 = vld [vmem:[%s1 + $0x120] sm:$0x1]
    %v17 = vld [vmem:[%s1 + $0x121] sm:$0x1]
    %vm18 = vcmask 64512
    %v19 = vsel %vm18, %v12, 0.0
    %v20 = vsel %vm18, %v13, 0.0
    %v21 = vadd.f32 %v19, %v20
    %v22 = vrot.slane %v21, 4
    %v23 = vadd.f32 %v21, %v22
    %v24 = vrot.slane %v23, 2
    %v25 = vadd.f32 %v23, %v24
    %v26 = vrot.slane %v25, 1
    %v27 = vadd.f32 %v25, %v26
    %v28 = vsel %vm18, %v14, 0.0
    %v29 = vsel %vm18, %v15, 0.0
    %v30 = vadd.f32 %v28, %v29
    %v31 = vrot.slane %v30, 4
    %v32 = vadd.f32 %v30, %v31
    %v33 = vrot.slane %v32, 2
    %v34 = vadd.f32 %v32, %v33
    %v35 = vrot.slane %v34, 1
    %v36 = vadd.f32 %v34, %v35
    %v37 = vrcp.pop 16.0
    %v38 = vmul.f32 %v27, %v37
    %v39 = vmul.f32 %v36, %v37
    %v40 = vmul.f32 %v12, %v12
    %v41 = vmul.f32 %v13, %v13
    %v42 = vmul.f32 %v14, %v14
    %v43 = vmul.f32 %v15, %v15
    %v44 = vsel %vm18, %v40, 0.0
    %v45 = vsel %vm18, %v41, 0.0
    %v46 = vadd.f32 %v44, %v45
    %v47 = vrot.slane %v46, 4
    %v48 = vadd.f32 %v46, %v47
    %v49 = vrot.slane %v48, 2
    %v50 = vadd.f32 %v48, %v49
    %v51 = vrot.slane %v50, 1
    %v52 = vadd.f32 %v50, %v51
    %v53 = vsel %vm18, %v42, 0.0
    %v54 = vsel %vm18, %v43, 0.0
    %v55 = vadd.f32 %v53, %v54
    %v56 = vrot.slane %v55, 4
    %v57 = vadd.f32 %v55, %v56
    %v58 = vrot.slane %v57, 2
    %v59 = vadd.f32 %v57, %v58
    %v60 = vrot.slane %v59, 1
    %v61 = vadd.f32 %v59, %v60
    %v62 = vmul.f32 %v52, %v37
    %v63 = vmul.f32 %v61, %v37
    %v64 = vmul.f32 %v38, %v38
    %v65 = vmul.f32 %v39, %v39
    %v66 = vsub.f32 %v62, %v64
    %v67 = vsub.f32 %v63, %v65
    %v68 = vadd.f32 %v66, 1e-05
    %v69 = vadd.f32 %v67, 1e-05
    %v70 = vrsqrt.pop %v68
    %v71 = vrsqrt.pop %v69
    %v72 = vmul.f32 %v68, %v70
    %v73 = vmul.f32 %v69, %v71
    %v74 = vsub.f32 %v12, %v38
    %v75 = vsub.f32 %v13, %v38
    %v76 = vsub.f32 %v14, %v39
    %v77 = vsub.f32 %v15, %v39
    %v78 = vmul.f32 %v74, %v70
    %v79 = vmul.f32 %v75, %v70
    %v80 = vmul.f32 %v76, %v71
    %v81 = vmul.f32 %v77, %v71
    %v82 = vlaneseq
    %v83 = vshrl.u32 %v82, 7
    %v84 = vsub.s32 0, %v83
    %v85 = vrot.slane %v16, %v84
    %v86 = vmul.f32 %v78, %v85
    %v87 = vmul.f32 %v79, %v85
    %v88 = vmul.f32 %v80, %v85
    %v89 = vmul.f32 %v81, %v85
    %v90 = vlaneseq
    %v91 = vshrl.u32 %v90, 7
    %v92 = vsub.s32 0, %v91
    %v93 = vrot.slane %v17, %v92
    %v94 = vadd.f32 %v86, %v93
    %v95 = vadd.f32 %v87, %v93
    %v96 = vadd.f32 %v88, %v93
    %v97 = vadd.f32 %v89, %v93
    %v98 = vld [vmem:[%s1 + $0x78] sm:$0xff]
    %v99 = vld [vmem:[%s1 + $0x80] sm:$0xff]
    %v100 = vld [vmem:[%s1 + $0x88] sm:$0xff]
    %v101 = vld [vmem:[%s1 + $0x90] sm:$0xff]
    %v102 = vsel %vm18, %v94, 0.0
    %103 = vadd.xlane.f32.xlu0 %v102
    %v104 = vpop.xlane.xlu0 %103
    %v105 = vsel %vm18, %v95, 0.0
    %106 = vadd.xlane.f32.xlu0 %v105
    %v107 = vpop.xlane.xlu0 %106
    %v108 = vsel %vm18, %v96, 0.0
    %109 = vadd.xlane.f32.xlu0 %v108
    %v110 = vpop.xlane.xlu0 %109
    %v111 = vsel %vm18, %v97, 0.0
    %112 = vadd.xlane.f32.xlu0 %v111
    %v113 = vpop.xlane.xlu0 %112
    %v114 = vadd.f32 %v104, %v107
    %v115 = vrot.slane %v114, 4
    %v116 = vadd.f32 %v114, %v115
    %v117 = vrot.slane %v116, 2
    %v118 = vadd.f32 %v116, %v117
    %v119 = vrot.slane %v118, 1
    %v120 = vadd.f32 %v118, %v119
    %v121 = vadd.f32 %v110, %v113
    %v122 = vrot.slane %v121, 4
    %v123 = vadd.f32 %v121, %v122
    %v124 = vrot.slane %v123, 2
    %v125 = vadd.f32 %v123, %v124
    %v126 = vrot.slane %v125, 1
    %v127 = vadd.f32 %v125, %v126
    %v128 = vmul.f32 %v94, %v94
    %v129 = vmul.f32 %v95, %v95
    %v130 = vmul.f32 %v96, %v96
    %v131 = vmul.f32 %v97, %v97
    %v132 = vsel %vm18, %v128, 0.0
    %133 = vadd.xlane.f32.xlu0 %v132
    %v134 = vpop.xlane.xlu0 %133
    %v135 = vsel %vm18, %v129, 0.0
    %136 = vadd.xlane.f32.xlu0 %v135
    %v137 = vpop.xlane.xlu0 %136
    %v138 = vsel %vm18, %v130, 0.0
    %139 = vadd.xlane.f32.xlu0 %v138
    %v140 = vpop.xlane.xlu0 %139
    %v141 = vsel %vm18, %v131, 0.0
    %142 = vadd.xlane.f32.xlu0 %v141
    %v143 = vpop.xlane.xlu0 %142
    %v144 = vadd.f32 %v134, %v137
    %v145 = vrot.slane %v144, 4
    %v146 = vadd.f32 %v144, %v145
    %v147 = vrot.slane %v146, 2
    %v148 = vadd.f32 %v146, %v147
    %v149 = vrot.slane %v148, 1
    %v150 = vadd.f32 %v148, %v149
    %v151 = vadd.f32 %v140, %v143
    %v152 = vrot.slane %v151, 4
    %v153 = vadd.f32 %v151, %v152
    %v154 = vrot.slane %v153, 2
    %v155 = vadd.f32 %v153, %v154
    %v156 = vrot.slane %v155, 1
    %v157 = vadd.f32 %v155, %v156
    %v158 = vmul.f32 %v120, 0.0078125
    %v159 = vmul.f32 %v127, 0.0078125
    %v160 = vmul.f32 %v150, 0.0078125
    %v161 = vmul.f32 %v157, 0.0078125
    %v162 = vmul.f32 %v158, %v158
    %v163 = vmul.f32 %v159, %v159
    %v164 = vsub.f32 %v160, %v162
    %v165 = vsub.f32 %v161, %v163
    %v166 = vsub.f32 %v94, %v158
    %v167 = vsub.f32 %v95, %v158
    %v168 = vsub.f32 %v96, %v159
    %v169 = vsub.f32 %v97, %v159
    %v170 = vadd.f32 %v164, 1e-05
    %v171 = vadd.f32 %v165, 1e-05
    %v172 = vrsqrt.pop %v170
    %v173 = vrsqrt.pop %v171
    %v174 = vmul.f32 %v166, %v172
    %v175 = vmul.f32 %v167, %v172
    %v176 = vmul.f32 %v168, %v173
    %v177 = vmul.f32 %v169, %v173
    %v178 = vmul.f32 %v174, %v98
    %v179 = vmul.f32 %v175, %v99
    %v180 = vmul.f32 %v176, %v98
    %v181 = vmul.f32 %v177, %v99
    %v182 = vadd.f32 %v178, %v100
    %v183 = vadd.f32 %v179, %v101
    %v184 = vadd.f32 %v180, %v100
    %v185 = vadd.f32 %v181, %v101
    %188 = vrot.lane.b32.xlu0 %v184, 8
    %v189 = vpop.permute.xlu0 %188
    %190 = vrot.lane.b32.xlu0 %v185, 8
    %v191 = vpop.permute.xlu0 %190
    %v194 = vsel %vm18, %v182, %v189
    %v195 = vsel %vm18, %v183, %v191
    %v196 = vld [vmem:[%s1] sm:$0xff]
    %v197 = vld [vmem:[%s1 + $0x8] sm:$0xff]
    %v198 = vld [vmem:[%s1 + $0xf8] sm:$0xff]
    %v199 = vld [vmem:[%s1 + $0x100] sm:$0xff]
    %201 = vset.pattern.permute.xlu0 0
    %202 = vperm.xlu0 %201, %v198
    %v203 = vpop.permute.xlu0 %202
    %206 = vset.pattern.permute.xlu0 0
    %207 = vperm.xlu0 %206, %v199
    %v208 = vpop.permute.xlu0 %207
    %vm210 = vcmask 130048
    %v212 = vsel %vm210, %v196, 0
    %v215 = vsel %vm210, %v197, 0
    %217 = vmatprep.subr.mxu0 0.0
    %218 = vmatpush1.msra.mxu0 0.0
    %219 = vmatprep.subr.mxu0 0.0
    %220 = vmatpush1.msra.mxu0 0.0
    %221 = vmatprep.subr.mxu0 0.0
    %222 = vmatpush1.msra.mxu0 0.0
    %223 = vmatprep.subr.mxu0 0.0
    %224 = vmatpush1.msra.mxu0 0.0
    %225 = vmatprep.subr.mxu0 0.0
    %226 = vmatpush1.msra.mxu0 0.0
    %227 = vmatprep.subr.mxu0 0.0
    %228 = vmatpush1.msra.mxu0 0.0
    %229 = vmatprep.subr.mxu0 0.0
    %230 = vmatpush1.msra.mxu0 0.0
    %231 = vmatprep.subr.mxu0 0.0
    %232 = vmatpush1.msra.mxu0 0.0
    %233 = vmatprep.subr.mxu0 0.0
    %234 = vmatpush1.msra.mxu0 0.0
    %235 = vmatprep.subr.mxu0 0.0
    %236 = vmatpush1.msra.mxu0 0.0
    %237 = vmatprep.subr.mxu0 0.0
    %238 = vmatpush1.msra.mxu0 0.0
    %239 = vmatprep.subr.mxu0 0.0
    %240 = vmatpush1.msra.mxu0 0.0
    %241 = vmatprep.subr.mxu0 0.0
    %242 = vmatpush1.msra.mxu0 0.0
    %243 = vmatprep.subr.mxu0 0.0
    %244 = vmatpush1.msra.mxu0 0.0
    %245 = vmatprep.subr.mxu0 0.0
    %246 = vmatpush1.msra.mxu0 %v195
    %247 = vmatprep.subr.mxu0 0.0
    %248 = vmatpush1.msra.mxu0 %v194
    %249 = vmatprep.subr.mxu0 0.0
    %250 = vmatpush2.msra.mxu0 0.0
    %251 = vmatprep.subr.mxu0 0.0
    %252 = vmatpush2.msra.mxu0 0.0
    %253 = vmatprep.subr.mxu0 0.0
    %254 = vmatpush2.msra.mxu0 0.0
    %255 = vmatprep.subr.mxu0 0.0
    %256 = vmatpush2.msra.mxu0 0.0
    %257 = vmatprep.subr.mxu0 0.0
    %258 = vmatpush2.msra.mxu0 0.0
    %259 = vmatprep.subr.mxu0 0.0
    %260 = vmatpush2.msra.mxu0 0.0
    %261 = vmatprep.subr.mxu0 0.0
    %262 = vmatpush2.msra.mxu0 0.0
    %263 = vmatprep.subr.mxu0 0.0
    %264 = vmatpush2.msra.mxu0 0.0
    %265 = vmatprep.subr.mxu0 0.0
    %266 = vmatpush2.msra.mxu0 0.0
    %267 = vmatprep.subr.mxu0 0.0
    %268 = vmatpush2.msra.mxu0 0.0
    %269 = vmatprep.subr.mxu0 0.0
    %270 = vmatpush2.msra.mxu0 0.0
    %271 = vmatprep.subr.mxu0 0.0
    %272 = vmatpush2.msra.mxu0 0.0
    %273 = vmatprep.subr.mxu0 0.0
    %274 = vmatpush2.msra.mxu0 0.0
    %275 = vmatprep.subr.mxu0 0.0
    %276 = vmatpush2.msra.mxu0 0.0
    %277 = vmatprep.subr.mxu0 0.0
    %278 = vmatpush2.msra.mxu0 0.0
    %279 = vmatprep.subr.mxu0 0.0
    %280 = vmatpush2.msra.mxu0 0.0
    %281 = vmatprep.mubr.f32.mxu0 0.0
    %282 = vmatmul.mubr.f32.gmra.mxu0 %v212
    %v283 = vpop.f32.mrf.mxu0
    %v284 = vadd.f32 %v203, %v283
    %v285 = vpop.f32.mrf.mxu0
    %286 = vmatprep.mubr.f32.mxu0 0.0
    %287 = vmatmul.mubr.f32.gmra.mxu0 %v215
    %v288 = vpop.f32.mrf.mxu0
    %v289 = vadd.f32 %v208, %v288
    %v290 = vpop.f32.mrf.mxu0
    %291 = vdwg.mxu0
    %v292 = vmax.f32 %v284, 0.0
    %v293 = vmax.f32 %v289, 0.0
    %296 = vrot.lane.b32.xlu0 %v292, 120
    %v297 = vpop.permute.xlu0 %296
    %298 = vrot.lane.b32.xlu0 %v293, 120
    %v299 = vpop.permute.xlu0 %298
    %v302 = vadd.f32 %v94, %v292
    %v303 = vadd.f32 %v95, %v293
    %v304 = vadd.f32 %v96, %v297
    %v305 = vadd.f32 %v97, %v299
    %v306 = vld [vmem:[%s1 + $0x98] sm:$0xff]
    %v307 = vld [vmem:[%s1 + $0xa0] sm:$0xff]
    %v308 = vld [vmem:[%s1 + $0xa8] sm:$0xff]
    %v309 = vld [vmem:[%s1 + $0xb0] sm:$0xff]
    %v310 = vsel %vm18, %v302, 0.0
    %311 = vadd.xlane.f32.xlu0 %v310
    %v312 = vpop.xlane.xlu0 %311
    %v313 = vsel %vm18, %v303, 0.0
    %314 = vadd.xlane.f32.xlu0 %v313
    %v315 = vpop.xlane.xlu0 %314
    %v316 = vsel %vm18, %v304, 0.0
    %317 = vadd.xlane.f32.xlu0 %v316
    %v318 = vpop.xlane.xlu0 %317
    %v319 = vsel %vm18, %v305, 0.0
    %320 = vadd.xlane.f32.xlu0 %v319
    %v321 = vpop.xlane.xlu0 %320
    %v322 = vadd.f32 %v312, %v315
    %v323 = vrot.slane %v322, 4
    %v324 = vadd.f32 %v322, %v323
    %v325 = vrot.slane %v324, 2
    %v326 = vadd.f32 %v324, %v325
    %v327 = vrot.slane %v326, 1
    %v328 = vadd.f32 %v326, %v327
    %v329 = vadd.f32 %v318, %v321
    %v330 = vrot.slane %v329, 4
    %v331 = vadd.f32 %v329, %v330
    %v332 = vrot.slane %v331, 2
    %v333 = vadd.f32 %v331, %v332
    %v334 = vrot.slane %v333, 1
    %v335 = vadd.f32 %v333, %v334
    %v336 = vmul.f32 %v302, %v302
    %v337 = vmul.f32 %v303, %v303
    %v338 = vmul.f32 %v304, %v304
    %v339 = vmul.f32 %v305, %v305
    %v340 = vsel %vm18, %v336, 0.0
    %341 = vadd.xlane.f32.xlu0 %v340
    %v342 = vpop.xlane.xlu0 %341
    %v343 = vsel %vm18, %v337, 0.0
    %344 = vadd.xlane.f32.xlu0 %v343
    %v345 = vpop.xlane.xlu0 %344
    %v346 = vsel %vm18, %v338, 0.0
    %347 = vadd.xlane.f32.xlu0 %v346
    %v348 = vpop.xlane.xlu0 %347
    %v349 = vsel %vm18, %v339, 0.0
    %350 = vadd.xlane.f32.xlu0 %v349
    %v351 = vpop.xlane.xlu0 %350
    %v352 = vadd.f32 %v342, %v345
    %v353 = vrot.slane %v352, 4
    %v354 = vadd.f32 %v352, %v353
    %v355 = vrot.slane %v354, 2
    %v356 = vadd.f32 %v354, %v355
    %v357 = vrot.slane %v356, 1
    %v358 = vadd.f32 %v356, %v357
    %v359 = vadd.f32 %v348, %v351
    %v360 = vrot.slane %v359, 4
    %v361 = vadd.f32 %v359, %v360
    %v362 = vrot.slane %v361, 2
    %v363 = vadd.f32 %v361, %v362
    %v364 = vrot.slane %v363, 1
    %v365 = vadd.f32 %v363, %v364
    %v366 = vmul.f32 %v328, 0.0078125
    %v367 = vmul.f32 %v335, 0.0078125
    %v368 = vmul.f32 %v358, 0.0078125
    %v369 = vmul.f32 %v365, 0.0078125
    %v370 = vmul.f32 %v366, %v366
    %v371 = vmul.f32 %v367, %v367
    %v372 = vsub.f32 %v368, %v370
    %v373 = vsub.f32 %v369, %v371
    %v374 = vsub.f32 %v302, %v366
    %v375 = vsub.f32 %v303, %v366
    %v376 = vsub.f32 %v304, %v367
    %v377 = vsub.f32 %v305, %v367
    %v378 = vadd.f32 %v372, 1e-05
    %v379 = vadd.f32 %v373, 1e-05
    %v380 = vrsqrt.pop %v378
    %v381 = vrsqrt.pop %v379
    %v382 = vmul.f32 %v374, %v380
    %v383 = vmul.f32 %v375, %v380
    %v384 = vmul.f32 %v376, %v381
    %v385 = vmul.f32 %v377, %v381
    %v386 = vmul.f32 %v382, %v306
    %v387 = vmul.f32 %v383, %v307
    %v388 = vmul.f32 %v384, %v306
    %v389 = vmul.f32 %v385, %v307
    %v390 = vadd.f32 %v386, %v308
    %v391 = vadd.f32 %v387, %v309
    %v392 = vadd.f32 %v388, %v308
    %v393 = vadd.f32 %v389, %v309
    %v394 = vld [vmem:[%s1 + $0x28] sm:$0xff]
    %v395 = vld [vmem:[%s1 + $0x122] sm:$0x1]
    %v396 = vld [vmem:[%s1 + $0x38] sm:$0xff]
    %v397 = vld [vmem:[%s1 + $0x40] sm:$0xff]
    %v398 = vld [vmem:[%s1 + $0x48] sm:$0xff]
    %v399 = vld [vmem:[%s1 + $0x50] sm:$0xff]
    %v400 = vld [vmem:[%s1 + $0x124] sm:$0x1]
    %v401 = vlaneseq
    %v402 = vshrl.u32 %v401, 7
    %v403 = vsub.s32 0, %v402
    %v404 = vrot.slane %v395, %v403
    %v406 = vsel %vm18, %v390, 0
    %v409 = vsel %vm18, %v391, 0
    %v412 = vsel %vm18, %v392, 0
    %v415 = vsel %vm18, %v393, 0
    %417 = vmatprep.subr.mxu0 0.0
    %418 = vmatpush1.msra.mxu0 0.0
    %419 = vmatprep.subr.mxu0 0.0
    %420 = vmatpush1.msra.mxu0 0.0
    %421 = vmatprep.subr.mxu0 0.0
    %422 = vmatpush1.msra.mxu0 0.0
    %423 = vmatprep.subr.mxu0 0.0
    %424 = vmatpush1.msra.mxu0 0.0
    %425 = vmatprep.subr.mxu0 0.0
    %426 = vmatpush1.msra.mxu0 0.0
    %427 = vmatprep.subr.mxu0 0.0
    %428 = vmatpush1.msra.mxu0 0.0
    %429 = vmatprep.subr.mxu0 0.0
    %430 = vmatpush1.msra.mxu0 0.0
    %431 = vmatprep.subr.mxu0 0.0
    %432 = vmatpush1.msra.mxu0 0.0
    %433 = vmatprep.subr.mxu0 0.0
    %434 = vmatpush1.msra.mxu0 0.0
    %435 = vmatprep.subr.mxu0 0.0
    %436 = vmatpush1.msra.mxu0 0.0
    %437 = vmatprep.subr.mxu0 0.0
    %438 = vmatpush1.msra.mxu0 0.0
    %439 = vmatprep.subr.mxu0 0.0
    %440 = vmatpush1.msra.mxu0 0.0
    %441 = vmatprep.subr.mxu0 0.0
    %442 = vmatpush1.msra.mxu0 0.0
    %443 = vmatprep.subr.mxu0 0.0
    %444 = vmatpush1.msra.mxu0 0.0
    %445 = vmatprep.subr.mxu0 0.0
    %446 = vmatpush1.msra.mxu0 0.0
    %447 = vmatprep.subr.mxu0 0.0
    %448 = vmatpush1.msra.mxu0 %v394
    %449 = vmatprep.subr.mxu0 0.0
    %450 = vmatpush2.msra.mxu0 0.0
    %451 = vmatprep.subr.mxu0 0.0
    %452 = vmatpush2.msra.mxu0 0.0
    %453 = vmatprep.subr.mxu0 0.0
    %454 = vmatpush2.msra.mxu0 0.0
    %455 = vmatprep.subr.mxu0 0.0
    %456 = vmatpush2.msra.mxu0 0.0
    %457 = vmatprep.subr.mxu0 0.0
    %458 = vmatpush2.msra.mxu0 0.0
    %459 = vmatprep.subr.mxu0 0.0
    %460 = vmatpush2.msra.mxu0 0.0
    %461 = vmatprep.subr.mxu0 0.0
    %462 = vmatpush2.msra.mxu0 0.0
    %463 = vmatprep.subr.mxu0 0.0
    %464 = vmatpush2.msra.mxu0 0.0
    %465 = vmatprep.subr.mxu0 0.0
    %466 = vmatpush2.msra.mxu0 0.0
    %467 = vmatprep.subr.mxu0 0.0
    %468 = vmatpush2.msra.mxu0 0.0
    %469 = vmatprep.subr.mxu0 0.0
    %470 = vmatpush2.msra.mxu0 0.0
    %471 = vmatprep.subr.mxu0 0.0
    %472 = vmatpush2.msra.mxu0 0.0
    %473 = vmatprep.subr.mxu0 0.0
    %474 = vmatpush2.msra.mxu0 0.0
    %475 = vmatprep.subr.mxu0 0.0
    %476 = vmatpush2.msra.mxu0 0.0
    %477 = vmatprep.subr.mxu0 0.0
    %478 = vmatpush2.msra.mxu0 0.0
    %479 = vmatprep.subr.mxu0 0.0
    %480 = vmatpush2.msra.mxu0 0.0
    %481 = vmatprep.mubr.f32.mxu0 0.0
    %482 = vmatmul.mubr.f32.gmra.mxu0 %v406
    %v483 = vpop.f32.mrf.mxu0
    %v484 = vadd.f32 %v404, %v483
    %v485 = vpop.f32.mrf.mxu0
    %486 = vmatprep.mubr.f32.mxu0 0.0
    %487 = vmatmul.mubr.f32.gmra.mxu0 %v409
    %v488 = vpop.f32.mrf.mxu0
    %v489 = vadd.f32 %v404, %v488
    %v490 = vpop.f32.mrf.mxu0
    %491 = vmatprep.mubr.f32.mxu0 0.0
    %492 = vmatmul.mubr.f32.gmra.mxu0 %v412
    %v493 = vpop.f32.mrf.mxu0
    %v494 = vadd.f32 %v404, %v493
    %v495 = vpop.f32.mrf.mxu0
    %496 = vmatprep.mubr.f32.mxu0 0.0
    %497 = vmatmul.mubr.f32.gmra.mxu0 %v415
    %v498 = vpop.f32.mrf.mxu0
    %v499 = vadd.f32 %v404, %v498
    %v500 = vpop.f32.mrf.mxu0
    %501 = vdwg.mxu0
    %v502 = vmax.f32 %v484, 0.0
    %v503 = vmax.f32 %v489, 0.0
    %v504 = vmax.f32 %v494, 0.0
    %v505 = vmax.f32 %v499, 0.0
    %v506 = vlaneseq
    %v507 = vshrl.u32 %v506, 7
    %v508 = vsub.s32 0, %v507
    %v509 = vrot.slane %v400, %v508
    %vm510 = vcmask 261120
    %v512 = vsel %vm510, %v502, 0
    %v515 = vsel %vm510, %v503, 0
    %v518 = vsel %vm510, %v504, 0
    %v521 = vsel %vm510, %v505, 0
    %523 = vmatprep.subr.mxu0 0.0
    %524 = vmatpush1.msra.mxu0 0.0
    %525 = vmatprep.subr.mxu0 0.0
    %526 = vmatpush1.msra.mxu0 0.0
    %527 = vmatprep.subr.mxu0 0.0
    %528 = vmatpush1.msra.mxu0 0.0
    %529 = vmatprep.subr.mxu0 0.0
    %530 = vmatpush1.msra.mxu0 0.0
    %531 = vmatprep.subr.mxu0 0.0
    %532 = vmatpush1.msra.mxu0 0.0
    %533 = vmatprep.subr.mxu0 0.0
    %534 = vmatpush1.msra.mxu0 0.0
    %535 = vmatprep.subr.mxu0 0.0
    %536 = vmatpush1.msra.mxu0 0.0
    %537 = vmatprep.subr.mxu0 0.0
    %538 = vmatpush1.msra.mxu0 0.0
    %539 = vmatprep.subr.mxu0 0.0
    %540 = vmatpush1.msra.mxu0 0.0
    %541 = vmatprep.subr.mxu0 0.0
    %542 = vmatpush1.msra.mxu0 0.0
    %543 = vmatprep.subr.mxu0 0.0
    %544 = vmatpush1.msra.mxu0 0.0
    %545 = vmatprep.subr.mxu0 0.0
    %546 = vmatpush1.msra.mxu0 0.0
    %547 = vmatprep.subr.mxu0 0.0
    %548 = vmatpush1.msra.mxu0 %v399
    %549 = vmatprep.subr.mxu0 0.0
    %550 = vmatpush1.msra.mxu0 %v398
    %551 = vmatprep.subr.mxu0 0.0
    %552 = vmatpush1.msra.mxu0 %v397
    %553 = vmatprep.subr.mxu0 0.0
    %554 = vmatpush1.msra.mxu0 %v396
    %555 = vmatprep.subr.mxu0 0.0
    %556 = vmatpush2.msra.mxu0 0.0
    %557 = vmatprep.subr.mxu0 0.0
    %558 = vmatpush2.msra.mxu0 0.0
    %559 = vmatprep.subr.mxu0 0.0
    %560 = vmatpush2.msra.mxu0 0.0
    %561 = vmatprep.subr.mxu0 0.0
    %562 = vmatpush2.msra.mxu0 0.0
    %563 = vmatprep.subr.mxu0 0.0
    %564 = vmatpush2.msra.mxu0 0.0
    %565 = vmatprep.subr.mxu0 0.0
    %566 = vmatpush2.msra.mxu0 0.0
    %567 = vmatprep.subr.mxu0 0.0
    %568 = vmatpush2.msra.mxu0 0.0
    %569 = vmatprep.subr.mxu0 0.0
    %570 = vmatpush2.msra.mxu0 0.0
    %571 = vmatprep.subr.mxu0 0.0
    %572 = vmatpush2.msra.mxu0 0.0
    %573 = vmatprep.subr.mxu0 0.0
    %574 = vmatpush2.msra.mxu0 0.0
    %575 = vmatprep.subr.mxu0 0.0
    %576 = vmatpush2.msra.mxu0 0.0
    %577 = vmatprep.subr.mxu0 0.0
    %578 = vmatpush2.msra.mxu0 0.0
    %579 = vmatprep.subr.mxu0 0.0
    %580 = vmatpush2.msra.mxu0 0.0
    %581 = vmatprep.subr.mxu0 0.0
    %582 = vmatpush2.msra.mxu0 0.0
    %583 = vmatprep.subr.mxu0 0.0
    %584 = vmatpush2.msra.mxu0 0.0
    %585 = vmatprep.subr.mxu0 0.0
    %586 = vmatpush2.msra.mxu0 0.0
    %587 = vmatprep.mubr.f32.mxu0 0.0
    %588 = vmatmul.mubr.f32.gmra.mxu0 %v512
    %v589 = vpop.f32.mrf.mxu0
    %v590 = vadd.f32 %v509, %v589
    %v591 = vpop.f32.mrf.mxu0
    %592 = vmatprep.mubr.f32.mxu0 0.0
    %593 = vmatmul.mubr.f32.gmra.mxu0 %v515
    %v594 = vpop.f32.mrf.mxu0
    %v595 = vadd.f32 %v509, %v594
    %v596 = vpop.f32.mrf.mxu0
    %597 = vmatprep.mubr.f32.mxu0 0.0
    %598 = vmatmul.mubr.f32.gmra.mxu0 %v518
    %v599 = vpop.f32.mrf.mxu0
    %v600 = vadd.f32 %v509, %v599
    %v601 = vpop.f32.mrf.mxu0
    %602 = vmatprep.mubr.f32.mxu0 0.0
    %603 = vmatmul.mubr.f32.gmra.mxu0 %v521
    %v604 = vpop.f32.mrf.mxu0
    %v605 = vadd.f32 %v509, %v604
    %v606 = vpop.f32.mrf.mxu0
    %607 = vdwg.mxu0
    %v608 = vadd.f32 %v302, %v590
    %v609 = vadd.f32 %v303, %v595
    %v610 = vadd.f32 %v304, %v600
    %v611 = vadd.f32 %v305, %v605
    %v612 = vld [vmem:[%s1 + $0xb8] sm:$0xff]
    %v613 = vld [vmem:[%s1 + $0xc0] sm:$0xff]
    %v614 = vld [vmem:[%s1 + $0xc8] sm:$0xff]
    %v615 = vld [vmem:[%s1 + $0xd0] sm:$0xff]
    %v616 = vsel %vm18, %v608, 0.0
    %617 = vadd.xlane.f32.xlu0 %v616
    %v618 = vpop.xlane.xlu0 %617
    %v619 = vsel %vm18, %v609, 0.0
    %620 = vadd.xlane.f32.xlu0 %v619
    %v621 = vpop.xlane.xlu0 %620
    %v622 = vsel %vm18, %v610, 0.0
    %623 = vadd.xlane.f32.xlu0 %v622
    %v624 = vpop.xlane.xlu0 %623
    %v625 = vsel %vm18, %v611, 0.0
    %626 = vadd.xlane.f32.xlu0 %v625
    %v627 = vpop.xlane.xlu0 %626
    %v628 = vadd.f32 %v618, %v621
    %v629 = vrot.slane %v628, 4
    %v630 = vadd.f32 %v628, %v629
    %v631 = vrot.slane %v630, 2
    %v632 = vadd.f32 %v630, %v631
    %v633 = vrot.slane %v632, 1
    %v634 = vadd.f32 %v632, %v633
    %v635 = vadd.f32 %v624, %v627
    %v636 = vrot.slane %v635, 4
    %v637 = vadd.f32 %v635, %v636
    %v638 = vrot.slane %v637, 2
    %v639 = vadd.f32 %v637, %v638
    %v640 = vrot.slane %v639, 1
    %v641 = vadd.f32 %v639, %v640
    %v642 = vmul.f32 %v608, %v608
    %v643 = vmul.f32 %v609, %v609
    %v644 = vmul.f32 %v610, %v610
    %v645 = vmul.f32 %v611, %v611
    %v646 = vsel %vm18, %v642, 0.0
    %647 = vadd.xlane.f32.xlu0 %v646
    %v648 = vpop.xlane.xlu0 %647
    %v649 = vsel %vm18, %v643, 0.0
    %650 = vadd.xlane.f32.xlu0 %v649
    %v651 = vpop.xlane.xlu0 %650
    %v652 = vsel %vm18, %v644, 0.0
    %653 = vadd.xlane.f32.xlu0 %v652
    %v654 = vpop.xlane.xlu0 %653
    %v655 = vsel %vm18, %v645, 0.0
    %656 = vadd.xlane.f32.xlu0 %v655
    %v657 = vpop.xlane.xlu0 %656
    %v658 = vadd.f32 %v648, %v651
    %v659 = vrot.slane %v658, 4
    %v660 = vadd.f32 %v658, %v659
    %v661 = vrot.slane %v660, 2
    %v662 = vadd.f32 %v660, %v661
    %v663 = vrot.slane %v662, 1
    %v664 = vadd.f32 %v662, %v663
    %v665 = vadd.f32 %v654, %v657
    %v666 = vrot.slane %v665, 4
    %v667 = vadd.f32 %v665, %v666
    %v668 = vrot.slane %v667, 2
    %v669 = vadd.f32 %v667, %v668
    %v670 = vrot.slane %v669, 1
    %v671 = vadd.f32 %v669, %v670
    %v672 = vmul.f32 %v634, 0.0078125
    %v673 = vmul.f32 %v641, 0.0078125
    %v674 = vmul.f32 %v664, 0.0078125
    %v675 = vmul.f32 %v671, 0.0078125
    %v676 = vmul.f32 %v672, %v672
    %v677 = vmul.f32 %v673, %v673
    %v678 = vsub.f32 %v674, %v676
    %v679 = vsub.f32 %v675, %v677
    %v680 = vsub.f32 %v608, %v672
    %v681 = vsub.f32 %v609, %v672
    %v682 = vsub.f32 %v610, %v673
    %v683 = vsub.f32 %v611, %v673
    %v684 = vadd.f32 %v678, 1e-05
    %v685 = vadd.f32 %v679, 1e-05
    %v686 = vrsqrt.pop %v684
    %v687 = vrsqrt.pop %v685
    %v688 = vmul.f32 %v680, %v686
    %v689 = vmul.f32 %v681, %v686
    %v690 = vmul.f32 %v682, %v687
    %v691 = vmul.f32 %v683, %v687
    %v692 = vmul.f32 %v688, %v612
    %v693 = vmul.f32 %v689, %v613
    %v694 = vmul.f32 %v690, %v612
    %v695 = vmul.f32 %v691, %v613
    %v696 = vadd.f32 %v692, %v614
    %v697 = vadd.f32 %v693, %v615
    %v698 = vadd.f32 %v694, %v614
    %v699 = vadd.f32 %v695, %v615
    %702 = vrot.lane.b32.xlu0 %v698, 8
    %v703 = vpop.permute.xlu0 %702
    %704 = vrot.lane.b32.xlu0 %v699, 8
    %v705 = vpop.permute.xlu0 %704
    %v708 = vsel %vm18, %v696, %v703
    %v709 = vsel %vm18, %v697, %v705
    %v710 = vld [vmem:[%s1 + $0x10] sm:$0xff]
    %v711 = vld [vmem:[%s1 + $0x18] sm:$0xff]
    %v712 = vld [vmem:[%s1 + $0x108] sm:$0xff]
    %v713 = vld [vmem:[%s1 + $0x110] sm:$0xff]
    %715 = vset.pattern.permute.xlu0 0
    %716 = vperm.xlu0 %715, %v712
    %v717 = vpop.permute.xlu0 %716
    %720 = vset.pattern.permute.xlu0 0
    %721 = vperm.xlu0 %720, %v713
    %v722 = vpop.permute.xlu0 %721
    %v725 = vsel %vm210, %v710, 0
    %v728 = vsel %vm210, %v711, 0
    %730 = vmatprep.subr.mxu0 0.0
    %731 = vmatpush1.msra.mxu0 0.0
    %732 = vmatprep.subr.mxu0 0.0
    %733 = vmatpush1.msra.mxu0 0.0
    %734 = vmatprep.subr.mxu0 0.0
    %735 = vmatpush1.msra.mxu0 0.0
    %736 = vmatprep.subr.mxu0 0.0
    %737 = vmatpush1.msra.mxu0 0.0
    %738 = vmatprep.subr.mxu0 0.0
    %739 = vmatpush1.msra.mxu0 0.0
    %740 = vmatprep.subr.mxu0 0.0
    %741 = vmatpush1.msra.mxu0 0.0
    %742 = vmatprep.subr.mxu0 0.0
    %743 = vmatpush1.msra.mxu0 0.0
    %744 = vmatprep.subr.mxu0 0.0
    %745 = vmatpush1.msra.mxu0 0.0
    %746 = vmatprep.subr.mxu0 0.0
    %747 = vmatpush1.msra.mxu0 0.0
    %748 = vmatprep.subr.mxu0 0.0
    %749 = vmatpush1.msra.mxu0 0.0
    %750 = vmatprep.subr.mxu0 0.0
    %751 = vmatpush1.msra.mxu0 0.0
    %752 = vmatprep.subr.mxu0 0.0
    %753 = vmatpush1.msra.mxu0 0.0
    %754 = vmatprep.subr.mxu0 0.0
    %755 = vmatpush1.msra.mxu0 0.0
    %756 = vmatprep.subr.mxu0 0.0
    %757 = vmatpush1.msra.mxu0 0.0
    %758 = vmatprep.subr.mxu0 0.0
    %759 = vmatpush1.msra.mxu0 %v709
    %760 = vmatprep.subr.mxu0 0.0
    %761 = vmatpush1.msra.mxu0 %v708
    %762 = vmatprep.subr.mxu0 0.0
    %763 = vmatpush2.msra.mxu0 0.0
    %764 = vmatprep.subr.mxu0 0.0
    %765 = vmatpush2.msra.mxu0 0.0
    %766 = vmatprep.subr.mxu0 0.0
    %767 = vmatpush2.msra.mxu0 0.0
    %768 = vmatprep.subr.mxu0 0.0
    %769 = vmatpush2.msra.mxu0 0.0
    %770 = vmatprep.subr.mxu0 0.0
    %771 = vmatpush2.msra.mxu0 0.0
    %772 = vmatprep.subr.mxu0 0.0
    %773 = vmatpush2.msra.mxu0 0.0
    %774 = vmatprep.subr.mxu0 0.0
    %775 = vmatpush2.msra.mxu0 0.0
    %776 = vmatprep.subr.mxu0 0.0
    %777 = vmatpush2.msra.mxu0 0.0
    %778 = vmatprep.subr.mxu0 0.0
    %779 = vmatpush2.msra.mxu0 0.0
    %780 = vmatprep.subr.mxu0 0.0
    %781 = vmatpush2.msra.mxu0 0.0
    %782 = vmatprep.subr.mxu0 0.0
    %783 = vmatpush2.msra.mxu0 0.0
    %784 = vmatprep.subr.mxu0 0.0
    %785 = vmatpush2.msra.mxu0 0.0
    %786 = vmatprep.subr.mxu0 0.0
    %787 = vmatpush2.msra.mxu0 0.0
    %788 = vmatprep.subr.mxu0 0.0
    %789 = vmatpush2.msra.mxu0 0.0
    %790 = vmatprep.subr.mxu0 0.0
    %791 = vmatpush2.msra.mxu0 0.0
    %792 = vmatprep.subr.mxu0 0.0
    %793 = vmatpush2.msra.mxu0 0.0
    %794 = vmatprep.mubr.f32.mxu0 0.0
    %795 = vmatmul.mubr.f32.gmra.mxu0 %v725
    %v796 = vpop.f32.mrf.mxu0
    %v797 = vadd.f32 %v717, %v796
    %v798 = vpop.f32.mrf.mxu0
    %799 = vmatprep.mubr.f32.mxu0 0.0
    %800 = vmatmul.mubr.f32.gmra.mxu0 %v728
    %v801 = vpop.f32.mrf.mxu0
    %v802 = vadd.f32 %v722, %v801
    %v803 = vpop.f32.mrf.mxu0
    %804 = vdwg.mxu0
    %v805 = vmax.f32 %v797, 0.0
    %v806 = vmax.f32 %v802, 0.0
    %809 = vrot.lane.b32.xlu0 %v805, 120
    %v810 = vpop.permute.xlu0 %809
    %811 = vrot.lane.b32.xlu0 %v806, 120
    %v812 = vpop.permute.xlu0 %811
    %v815 = vadd.f32 %v608, %v805
    %v816 = vadd.f32 %v609, %v806
    %v817 = vadd.f32 %v610, %v810
    %v818 = vadd.f32 %v611, %v812
    %v819 = vld [vmem:[%s1 + $0xd8] sm:$0xff]
    %v820 = vld [vmem:[%s1 + $0xe0] sm:$0xff]
    %v821 = vld [vmem:[%s1 + $0xe8] sm:$0xff]
    %v822 = vld [vmem:[%s1 + $0xf0] sm:$0xff]
    %v823 = vsel %vm18, %v815, 0.0
    %824 = vadd.xlane.f32.xlu0 %v823
    %v825 = vpop.xlane.xlu0 %824
    %v826 = vsel %vm18, %v816, 0.0
    %827 = vadd.xlane.f32.xlu0 %v826
    %v828 = vpop.xlane.xlu0 %827
    %v829 = vsel %vm18, %v817, 0.0
    %830 = vadd.xlane.f32.xlu0 %v829
    %v831 = vpop.xlane.xlu0 %830
    %v832 = vsel %vm18, %v818, 0.0
    %833 = vadd.xlane.f32.xlu0 %v832
    %v834 = vpop.xlane.xlu0 %833
    %v835 = vadd.f32 %v825, %v828
    %v836 = vrot.slane %v835, 4
    %v837 = vadd.f32 %v835, %v836
    %v838 = vrot.slane %v837, 2
    %v839 = vadd.f32 %v837, %v838
    %v840 = vrot.slane %v839, 1
    %v841 = vadd.f32 %v839, %v840
    %v842 = vadd.f32 %v831, %v834
    %v843 = vrot.slane %v842, 4
    %v844 = vadd.f32 %v842, %v843
    %v845 = vrot.slane %v844, 2
    %v846 = vadd.f32 %v844, %v845
    %v847 = vrot.slane %v846, 1
    %v848 = vadd.f32 %v846, %v847
    %v849 = vmul.f32 %v815, %v815
    %v850 = vmul.f32 %v816, %v816
    %v851 = vmul.f32 %v817, %v817
    %v852 = vmul.f32 %v818, %v818
    %v853 = vsel %vm18, %v849, 0.0
    %854 = vadd.xlane.f32.xlu0 %v853
    %v855 = vpop.xlane.xlu0 %854
    %v856 = vsel %vm18, %v850, 0.0
    %857 = vadd.xlane.f32.xlu0 %v856
    %v858 = vpop.xlane.xlu0 %857
    %v859 = vsel %vm18, %v851, 0.0
    %860 = vadd.xlane.f32.xlu0 %v859
    %v861 = vpop.xlane.xlu0 %860
    %v862 = vsel %vm18, %v852, 0.0
    %863 = vadd.xlane.f32.xlu0 %v862
    %v864 = vpop.xlane.xlu0 %863
    %v865 = vadd.f32 %v855, %v858
    %v866 = vrot.slane %v865, 4
    %v867 = vadd.f32 %v865, %v866
    %v868 = vrot.slane %v867, 2
    %v869 = vadd.f32 %v867, %v868
    %v870 = vrot.slane %v869, 1
    %v871 = vadd.f32 %v869, %v870
    %v872 = vadd.f32 %v861, %v864
    %v873 = vrot.slane %v872, 4
    %v874 = vadd.f32 %v872, %v873
    %v875 = vrot.slane %v874, 2
    %v876 = vadd.f32 %v874, %v875
    %v877 = vrot.slane %v876, 1
    %v878 = vadd.f32 %v876, %v877
    %v879 = vmul.f32 %v841, 0.0078125
    %v880 = vmul.f32 %v848, 0.0078125
    %v881 = vmul.f32 %v871, 0.0078125
    %v882 = vmul.f32 %v878, 0.0078125
    %v883 = vmul.f32 %v879, %v879
    %v884 = vmul.f32 %v880, %v880
    %v885 = vsub.f32 %v881, %v883
    %v886 = vsub.f32 %v882, %v884
    %v887 = vsub.f32 %v815, %v879
    %v888 = vsub.f32 %v816, %v879
    %v889 = vsub.f32 %v817, %v880
    %v890 = vsub.f32 %v818, %v880
    %v891 = vadd.f32 %v885, 1e-05
    %v892 = vadd.f32 %v886, 1e-05
    %v893 = vrsqrt.pop %v891
    %v894 = vrsqrt.pop %v892
    %v895 = vmul.f32 %v887, %v893
    %v896 = vmul.f32 %v888, %v893
    %v897 = vmul.f32 %v889, %v894
    %v898 = vmul.f32 %v890, %v894
    %v899 = vmul.f32 %v895, %v819
    %v900 = vmul.f32 %v896, %v820
    %v901 = vmul.f32 %v897, %v819
    %v902 = vmul.f32 %v898, %v820
    %v903 = vadd.f32 %v899, %v821
    %v904 = vadd.f32 %v900, %v822
    %v905 = vadd.f32 %v901, %v821
    %v906 = vadd.f32 %v902, %v822
    %v907 = vld [vmem:[%s1 + $0x30] sm:$0xff]
    %v908 = vld [vmem:[%s1 + $0x123] sm:$0x1]
    %v909 = vld [vmem:[%s1 + $0x58] sm:$0xff]
    %v910 = vld [vmem:[%s1 + $0x60] sm:$0xff]
    %v911 = vld [vmem:[%s1 + $0x68] sm:$0xff]
    %v912 = vld [vmem:[%s1 + $0x70] sm:$0xff]
    %v913 = vld [vmem:[%s1 + $0x125] sm:$0x1]
    %v914 = vlaneseq
    %v915 = vshrl.u32 %v914, 7
    %v916 = vsub.s32 0, %v915
    %v917 = vrot.slane %v908, %v916
    %v919 = vsel %vm18, %v903, 0
    %v922 = vsel %vm18, %v904, 0
    %v925 = vsel %vm18, %v905, 0
    %v928 = vsel %vm18, %v906, 0
    %930 = vmatprep.subr.mxu0 0.0
    %931 = vmatpush1.msra.mxu0 0.0
    %932 = vmatprep.subr.mxu0 0.0
    %933 = vmatpush1.msra.mxu0 0.0
    %934 = vmatprep.subr.mxu0 0.0
    %935 = vmatpush1.msra.mxu0 0.0
    %936 = vmatprep.subr.mxu0 0.0
    %937 = vmatpush1.msra.mxu0 0.0
    %938 = vmatprep.subr.mxu0 0.0
    %939 = vmatpush1.msra.mxu0 0.0
    %940 = vmatprep.subr.mxu0 0.0
    %941 = vmatpush1.msra.mxu0 0.0
    %942 = vmatprep.subr.mxu0 0.0
    %943 = vmatpush1.msra.mxu0 0.0
    %944 = vmatprep.subr.mxu0 0.0
    %945 = vmatpush1.msra.mxu0 0.0
    %946 = vmatprep.subr.mxu0 0.0
    %947 = vmatpush1.msra.mxu0 0.0
    %948 = vmatprep.subr.mxu0 0.0
    %949 = vmatpush1.msra.mxu0 0.0
    %950 = vmatprep.subr.mxu0 0.0
    %951 = vmatpush1.msra.mxu0 0.0
    %952 = vmatprep.subr.mxu0 0.0
    %953 = vmatpush1.msra.mxu0 0.0
    %954 = vmatprep.subr.mxu0 0.0
    %955 = vmatpush1.msra.mxu0 0.0
    %956 = vmatprep.subr.mxu0 0.0
    %957 = vmatpush1.msra.mxu0 0.0
    %958 = vmatprep.subr.mxu0 0.0
    %959 = vmatpush1.msra.mxu0 0.0
    %960 = vmatprep.subr.mxu0 0.0
    %961 = vmatpush1.msra.mxu0 %v907
    %962 = vmatprep.subr.mxu0 0.0
    %963 = vmatpush2.msra.mxu0 0.0
    %964 = vmatprep.subr.mxu0 0.0
    %965 = vmatpush2.msra.mxu0 0.0
    %966 = vmatprep.subr.mxu0 0.0
    %967 = vmatpush2.msra.mxu0 0.0
    %968 = vmatprep.subr.mxu0 0.0
    %969 = vmatpush2.msra.mxu0 0.0
    %970 = vmatprep.subr.mxu0 0.0
    %971 = vmatpush2.msra.mxu0 0.0
    %972 = vmatprep.subr.mxu0 0.0
    %973 = vmatpush2.msra.mxu0 0.0
    %974 = vmatprep.subr.mxu0 0.0
    %975 = vmatpush2.msra.mxu0 0.0
    %976 = vmatprep.subr.mxu0 0.0
    %977 = vmatpush2.msra.mxu0 0.0
    %978 = vmatprep.subr.mxu0 0.0
    %979 = vmatpush2.msra.mxu0 0.0
    %980 = vmatprep.subr.mxu0 0.0
    %981 = vmatpush2.msra.mxu0 0.0
    %982 = vmatprep.subr.mxu0 0.0
    %983 = vmatpush2.msra.mxu0 0.0
    %984 = vmatprep.subr.mxu0 0.0
    %985 = vmatpush2.msra.mxu0 0.0
    %986 = vmatprep.subr.mxu0 0.0
    %987 = vmatpush2.msra.mxu0 0.0
    %988 = vmatprep.subr.mxu0 0.0
    %989 = vmatpush2.msra.mxu0 0.0
    %990 = vmatprep.subr.mxu0 0.0
    %991 = vmatpush2.msra.mxu0 0.0
    %992 = vmatprep.subr.mxu0 0.0
    %993 = vmatpush2.msra.mxu0 0.0
    %994 = vmatprep.mubr.f32.mxu0 0.0
    %995 = vmatmul.mubr.f32.gmra.mxu0 %v919
    %v996 = vpop.f32.mrf.mxu0
    %v997 = vadd.f32 %v917, %v996
    %v998 = vpop.f32.mrf.mxu0
    %999 = vmatprep.mubr.f32.mxu0 0.0
    %1000 = vmatmul.mubr.f32.gmra.mxu0 %v922
    %v1001 = vpop.f32.mrf.mxu0
    %v1002 = vadd.f32 %v917, %v1001
    %v1003 = vpop.f32.mrf.mxu0
    %1004 = vmatprep.mubr.f32.mxu0 0.0
    %1005 = vmatmul.mubr.f32.gmra.mxu0 %v925
    %v1006 = vpop.f32.mrf.mxu0
    %v1007 = vadd.f32 %v917, %v1006
    %v1008 = vpop.f32.mrf.mxu0
    %1009 = vmatprep.mubr.f32.mxu0 0.0
    %1010 = vmatmul.mubr.f32.gmra.mxu0 %v928
    %v1011 = vpop.f32.mrf.mxu0
    %v1012 = vadd.f32 %v917, %v1011
    %v1013 = vpop.f32.mrf.mxu0
    %1014 = vdwg.mxu0
    %v1015 = vmax.f32 %v997, 0.0
    %v1016 = vmax.f32 %v1002, 0.0
    %v1017 = vmax.f32 %v1007, 0.0
    %v1018 = vmax.f32 %v1012, 0.0
    %v1019 = vlaneseq
    %v1020 = vshrl.u32 %v1019, 7
    %v1021 = vsub.s32 0, %v1020
    %v1022 = vrot.slane %v913, %v1021
    %v1024 = vsel %vm510, %v1015, 0
    %v1027 = vsel %vm510, %v1016, 0
    %v1030 = vsel %vm510, %v1017, 0
    %v1033 = vsel %vm510, %v1018, 0
    %1035 = vmatprep.subr.mxu0 0.0
    %1036 = vmatpush1.msra.mxu0 0.0
    %1037 = vmatprep.subr.mxu0 0.0
    %1038 = vmatpush1.msra.mxu0 0.0
    %1039 = vmatprep.subr.mxu0 0.0
    %1040 = vmatpush1.msra.mxu0 0.0
    %1041 = vmatprep.subr.mxu0 0.0
    %1042 = vmatpush1.msra.mxu0 0.0
    %1043 = vmatprep.subr.mxu0 0.0
    %1044 = vmatpush1.msra.mxu0 0.0
    %1045 = vmatprep.subr.mxu0 0.0
    %1046 = vmatpush1.msra.mxu0 0.0
    %1047 = vmatprep.subr.mxu0 0.0
    %1048 = vmatpush1.msra.mxu0 0.0
    %1049 = vmatprep.subr.mxu0 0.0
    %1050 = vmatpush1.msra.mxu0 0.0
    %1051 = vmatprep.subr.mxu0 0.0
    %1052 = vmatpush1.msra.mxu0 0.0
    %1053 = vmatprep.subr.mxu0 0.0
    %1054 = vmatpush1.msra.mxu0 0.0
    %1055 = vmatprep.subr.mxu0 0.0
    %1056 = vmatpush1.msra.mxu0 0.0
    %1057 = vmatprep.subr.mxu0 0.0
    %1058 = vmatpush1.msra.mxu0 0.0
    %1059 = vmatprep.subr.mxu0 0.0
    %1060 = vmatpush1.msra.mxu0 %v912
    %1061 = vmatprep.subr.mxu0 0.0
    %1062 = vmatpush1.msra.mxu0 %v911
    %1063 = vmatprep.subr.mxu0 0.0
    %1064 = vmatpush1.msra.mxu0 %v910
    %1065 = vmatprep.subr.mxu0 0.0
    %1066 = vmatpush1.msra.mxu0 %v909
    %1067 = vmatprep.subr.mxu0 0.0
    %1068 = vmatpush2.msra.mxu0 0.0
    %1069 = vmatprep.subr.mxu0 0.0
    %1070 = vmatpush2.msra.mxu0 0.0
    %1071 = vmatprep.subr.mxu0 0.0
    %1072 = vmatpush2.msra.mxu0 0.0
    %1073 = vmatprep.subr.mxu0 0.0
    %1074 = vmatpush2.msra.mxu0 0.0
    %1075 = vmatprep.subr.mxu0 0.0
    %1076 = vmatpush2.msra.mxu0 0.0
    %1077 = vmatprep.subr.mxu0 0.0
    %1078 = vmatpush2.msra.mxu0 0.0
    %1079 = vmatprep.subr.mxu0 0.0
    %1080 = vmatpush2.msra.mxu0 0.0
    %1081 = vmatprep.subr.mxu0 0.0
    %1082 = vmatpush2.msra.mxu0 0.0
    %1083 = vmatprep.subr.mxu0 0.0
    %1084 = vmatpush2.msra.mxu0 0.0
    %1085 = vmatprep.subr.mxu0 0.0
    %1086 = vmatpush2.msra.mxu0 0.0
    %1087 = vmatprep.subr.mxu0 0.0
    %1088 = vmatpush2.msra.mxu0 0.0
    %1089 = vmatprep.subr.mxu0 0.0
    %1090 = vmatpush2.msra.mxu0 0.0
    %1091 = vmatprep.subr.mxu0 0.0
    %1092 = vmatpush2.msra.mxu0 0.0
    %1093 = vmatprep.subr.mxu0 0.0
    %1094 = vmatpush2.msra.mxu0 0.0
    %1095 = vmatprep.subr.mxu0 0.0
    %1096 = vmatpush2.msra.mxu0 0.0
    %1097 = vmatprep.subr.mxu0 0.0
    %1098 = vmatpush2.msra.mxu0 0.0
    %1099 = vmatprep.mubr.f32.mxu0 0.0
    %1100 = vmatmul.mubr.f32.gmra.mxu0 %v1024
    %v1101 = vpop.f32.mrf.mxu0
    %v1102 = vadd.f32 %v1022, %v1101
    %v1103 = vpop.f32.mrf.mxu0
    %1104 = vmatprep.mubr.f32.mxu0 0.0
    %1105 = vmatmul.mubr.f32.gmra.mxu0 %v1027
    %v1106 = vpop.f32.mrf.mxu0
    %v1107 = vadd.f32 %v1022, %v1106
    %v1108 = vpop.f32.mrf.mxu0
    %1109 = vmatprep.mubr.f32.mxu0 0.0
    %1110 = vmatmul.mubr.f32.gmra.mxu0 %v1030
    %v1111 = vpop.f32.mrf.mxu0
    %v1112 = vadd.f32 %v1022, %v1111
    %v1113 = vpop.f32.mrf.mxu0
    %1114 = vmatprep.mubr.f32.mxu0 0.0
    %1115 = vmatmul.mubr.f32.gmra.mxu0 %v1033
    %v1116 = vpop.f32.mrf.mxu0
    %v1117 = vadd.f32 %v1022, %v1116
    %v1118 = vpop.f32.mrf.mxu0
    %1119 = vdwg.mxu0
    %v1120 = vadd.f32 %v815, %v1102
    %v1121 = vadd.f32 %v816, %v1107
    %v1122 = vadd.f32 %v817, %v1112
    %v1123 = vadd.f32 %v818, %v1117
    %1126 = vrot.lane.b32.xlu0 %v1122, 8
    %v1127 = vpop.permute.xlu0 %1126
    %1128 = vrot.lane.b32.xlu0 %v1123, 8
    %v1129 = vpop.permute.xlu0 %1128
    %v1132 = vsel %vm18, %v1120, %v1127
    %v1133 = vsel %vm18, %v1121, %v1129
    %v1134 = vld [vmem:[%s1 + $0x20] sm:$0xff]
    %v1135 = vld [vmem:[%s1 + $0x118] sm:$0xff]
    %1137 = vset.pattern.permute.xlu0 0
    %1138 = vperm.xlu0 %1137, %v1135
    %v1139 = vpop.permute.xlu0 %1138
    %v1142 = vsel %vm210, %v1134, 0
    %1144 = vmatprep.subr.mxu0 0.0
    %1145 = vmatpush1.msra.mxu0 0.0
    %1146 = vmatprep.subr.mxu0 0.0
    %1147 = vmatpush1.msra.mxu0 0.0
    %1148 = vmatprep.subr.mxu0 0.0
    %1149 = vmatpush1.msra.mxu0 0.0
    %1150 = vmatprep.subr.mxu0 0.0
    %1151 = vmatpush1.msra.mxu0 0.0
    %1152 = vmatprep.subr.mxu0 0.0
    %1153 = vmatpush1.msra.mxu0 0.0
    %1154 = vmatprep.subr.mxu0 0.0
    %1155 = vmatpush1.msra.mxu0 0.0
    %1156 = vmatprep.subr.mxu0 0.0
    %1157 = vmatpush1.msra.mxu0 0.0
    %1158 = vmatprep.subr.mxu0 0.0
    %1159 = vmatpush1.msra.mxu0 0.0
    %1160 = vmatprep.subr.mxu0 0.0
    %1161 = vmatpush1.msra.mxu0 0.0
    %1162 = vmatprep.subr.mxu0 0.0
    %1163 = vmatpush1.msra.mxu0 0.0
    %1164 = vmatprep.subr.mxu0 0.0
    %1165 = vmatpush1.msra.mxu0 0.0
    %1166 = vmatprep.subr.mxu0 0.0
    %1167 = vmatpush1.msra.mxu0 0.0
    %1168 = vmatprep.subr.mxu0 0.0
    %1169 = vmatpush1.msra.mxu0 0.0
    %1170 = vmatprep.subr.mxu0 0.0
    %1171 = vmatpush1.msra.mxu0 0.0
    %1172 = vmatprep.subr.mxu0 0.0
    %1173 = vmatpush1.msra.mxu0 %v1133
    %1174 = vmatprep.subr.mxu0 0.0
    %1175 = vmatpush1.msra.mxu0 %v1132
    %1176 = vmatprep.subr.mxu0 0.0
    %1177 = vmatpush2.msra.mxu0 0.0
    %1178 = vmatprep.subr.mxu0 0.0
    %1179 = vmatpush2.msra.mxu0 0.0
    %1180 = vmatprep.subr.mxu0 0.0
    %1181 = vmatpush2.msra.mxu0 0.0
    %1182 = vmatprep.subr.mxu0 0.0
    %1183 = vmatpush2.msra.mxu0 0.0
    %1184 = vmatprep.subr.mxu0 0.0
    %1185 = vmatpush2.msra.mxu0 0.0
    %1186 = vmatprep.subr.mxu0 0.0
    %1187 = vmatpush2.msra.mxu0 0.0
    %1188 = vmatprep.subr.mxu0 0.0
    %1189 = vmatpush2.msra.mxu0 0.0
    %1190 = vmatprep.subr.mxu0 0.0
    %1191 = vmatpush2.msra.mxu0 0.0
    %1192 = vmatprep.subr.mxu0 0.0
    %1193 = vmatpush2.msra.mxu0 0.0
    %1194 = vmatprep.subr.mxu0 0.0
    %1195 = vmatpush2.msra.mxu0 0.0
    %1196 = vmatprep.subr.mxu0 0.0
    %1197 = vmatpush2.msra.mxu0 0.0
    %1198 = vmatprep.subr.mxu0 0.0
    %1199 = vmatpush2.msra.mxu0 0.0
    %1200 = vmatprep.subr.mxu0 0.0
    %1201 = vmatpush2.msra.mxu0 0.0
    %1202 = vmatprep.subr.mxu0 0.0
    %1203 = vmatpush2.msra.mxu0 0.0
    %1204 = vmatprep.subr.mxu0 0.0
    %1205 = vmatpush2.msra.mxu0 0.0
    %1206 = vmatprep.subr.mxu0 0.0
    %1207 = vmatpush2.msra.mxu0 0.0
    %1208 = vmatprep.mubr.f32.mxu0 0.0
    %1209 = vmatmul.mubr.f32.gmra.mxu0 %v1142
    %v1210 = vpop.f32.mrf.mxu0
    %v1211 = vadd.f32 %v1139, %v1210
    %v1212 = vpop.f32.mrf.mxu0
    %1213 = vdwg.mxu0
    %1215 = vrot.lane.b32.xlu0 %v73, 8
    %v1216 = vpop.permute.xlu0 %1215
    %v1218 = vsel %vm18, %v72, %v1216
    %1220 = vrot.lane.b32.xlu0 %v39, 8
    %v1221 = vpop.permute.xlu0 %1220
    %v1223 = vsel %vm18, %v38, %v1221
    %v1224 = vadd.f32 %v16, 1e-10
    %v1225 = vrcp.pop %v1224
    %v1226 = vsub.f32 %v1211, %v93
    %v1227 = vlaneseq
    %v1228 = vshrl.u32 %v1227, 7
    %v1229 = vsub.s32 0, %v1228
    %v1230 = vrot.slane %v1225, %v1229
    %v1231 = vmul.f32 %v1226, %v1230
    %v1232 = vlaneseq
    %v1233 = vshrl.u32 %v1232, 7
    %v1234 = vsub.s32 0, %v1233
    %v1235 = vrot.slane %v1218, %v1234
    %v1236 = vmul.f32 %v1231, %v1235
    %v1237 = vlaneseq
    %v1238 = vshrl.u32 %v1237, 7
    %v1239 = vsub.s32 0, %v1238
    %v1240 = vrot.slane %v1223, %v1239
    %v1241 = vadd.f32 %v1236, %v1240
    %v1243 = vrot.slane %v1241, 1
    %1244 = vrot.lane.b32.xlu0 %v1243, 8
    %v1245 = vpop.permute.xlu0 %1244
    %v1247 = vrot.slane %v1241, 2
    %1248 = vrot.lane.b32.xlu0 %v1247, 16
    %v1249 = vpop.permute.xlu0 %1248
    %v1251 = vrot.slane %v1241, 3
    %1252 = vrot.lane.b32.xlu0 %v1251, 24
    %v1253 = vpop.permute.xlu0 %1252
    %v1255 = vrot.slane %v1241, 4
    %1256 = vrot.lane.b32.xlu0 %v1255, 32
    %v1257 = vpop.permute.xlu0 %1256
    %v1259 = vrot.slane %v1241, 5
    %1260 = vrot.lane.b32.xlu0 %v1259, 40
    %v1261 = vpop.permute.xlu0 %1260
    %v1263 = vrot.slane %v1241, 6
    %1264 = vrot.lane.b32.xlu0 %v1263, 48
    %v1265 = vpop.permute.xlu0 %1264
    %v1267 = vrot.slane %v1241, 7
    %1268 = vrot.lane.b32.xlu0 %v1267, 56
    %v1269 = vpop.permute.xlu0 %1268
    %1271 = vrot.lane.b32.xlu0 %v1241, 56
    %v1272 = vpop.permute.xlu0 %1271
    %1274 = vrot.lane.b32.xlu0 %v1243, 64
    %v1275 = vpop.permute.xlu0 %1274
    %1277 = vrot.lane.b32.xlu0 %v1247, 72
    %v1278 = vpop.permute.xlu0 %1277
    %1280 = vrot.lane.b32.xlu0 %v1251, 80
    %v1281 = vpop.permute.xlu0 %1280
    %1283 = vrot.lane.b32.xlu0 %v1255, 88
    %v1284 = vpop.permute.xlu0 %1283
    %1286 = vrot.lane.b32.xlu0 %v1259, 96
    %v1287 = vpop.permute.xlu0 %1286
    %1289 = vrot.lane.b32.xlu0 %v1263, 104
    %v1290 = vpop.permute.xlu0 %1289
    %1292 = vrot.lane.b32.xlu0 %v1267, 112
    %v1293 = vpop.permute.xlu0 %1292
    %v1295 = vsel %vm18, %v1241, %v1245
    %v1296 = vsel %vm210, %v1295, %v1249
    %vm1297 = vcmask 195584
    %v1298 = vsel %vm1297, %v1296, %v1253
    %v1299 = vsel %vm510, %v1298, %v1257
    %vm1300 = vcmask 326656
    %v1301 = vsel %vm1300, %v1299, %v1261
    %vm1302 = vcmask 392192
    %v1303 = vsel %vm1302, %v1301, %v1265
    %vm1304 = vcmask 457728
    %v1305 = vsel %vm1304, %v1303, %v1269
    %vm1306 = vcmask 523264
    %v1307 = vsel %vm1306, %v1305, %v1272
    %vm1308 = vcmask 588800
    %v1309 = vsel %vm1308, %v1307, %v1275
    %vm1310 = vcmask 654336
    %v1311 = vsel %vm1310, %v1309, %v1278
    %vm1312 = vcmask 719872
    %v1313 = vsel %vm1312, %v1311, %v1281
    %vm1314 = vcmask 785408
    %v1315 = vsel %vm1314, %v1313, %v1284
    %vm1316 = vcmask 850944
    %v1317 = vsel %vm1316, %v1315, %v1287
    %vm1318 = vcmask 916480
    %v1319 = vsel %vm1318, %v1317, %v1290
    %vm1320 = vcmask 982016
    %v1321 = vsel %vm1320, %v1319, %v1293
    %1322 = vst [vmem:[#allocation2] sm:$0x1] %v1321
    // Predicated region
    $region10: #{tpu_custom_call.1} parent=1 // pred_check
      _
    $region11: #{tpu_custom_call.1} parent=1 // pred_check_branch
      %1324 = sbr.rel (0) target = $region13
    $region12: #{tpu_custom_call.1} parent=1 // pred_region
      %s1326 = ssub.s32 16, 16
      %1327 = vsyncadd [#allocation3], %s1326
      %s1329 = sshll.u32 [#allocation2], 4
      %s1330 = int_to_ptr.vmem [resolvable:$true] %s1329
      %1332 = dma.vmem_to_hbm [thread:$0]  %s1330, 16, %s2, [#allocation3]
    $region13: #{tpu_custom_call.1} parent=1 // pred_fallthru
      _
    // Predicated region
    $region14: #{tpu_custom_call.1} parent=1 // pred_check
      _
    $region15: #{tpu_custom_call.1} parent=1 // pred_check_branch
      %1334 = sbr.rel (0) target = $region17
    $region16: #{tpu_custom_call.1} parent=1 // pred_region
      %1335 = dma.done [#allocation3], 16
    $region17: #{tpu_custom_call.1} parent=1 // pred_fallthru
      _
    %1336 = vsyncpa [#allocation3], 1

</llo_original>
